<compile_context>
chip_gen: v7x
topology: tpu7x:2x2x1
jax: 0.10.0
libtpu: 0.0.40
codegen_flags: <defaults>
</compile_context>

<pallas_src>
import functools

import jax
import jax.numpy as jnp
from jax.experimental import pallas as pl
from jax.experimental.pallas import tpu as pltpu

D_IN = 128
D_H = 768
D_OUT = 128


def mlp_kernel(x_ref, w1_ref, b1_ref, w2_ref, b2_ref, w3_ref, b3_ref, o_ref,
               h1_ref, h2_ref):
    # Layer 1: (tb,128) @ (128,768), f32 accumulate, f32 bias + ReLU,
    # stage result in bf16 VMEM scratch for the next MXU pass.
    h1 = jnp.dot(x_ref[...], w1_ref[...], preferred_element_type=jnp.float32)
    h1_ref[...] = jnp.maximum(h1 + b1_ref[...], 0.0).astype(h1_ref.dtype)

    # Layer 2: (tb,768) @ (768,768)
    h2 = jnp.dot(h1_ref[...], w2_ref[...], preferred_element_type=jnp.float32)
    h2_ref[...] = jnp.maximum(h2 + b2_ref[...], 0.0).astype(h2_ref.dtype)

    # Layer 3: (tb,768) @ (768,128)
    y = jnp.dot(h2_ref[...], w3_ref[...], preferred_element_type=jnp.float32)
    o_ref[...] = (y + b3_ref[...]).astype(o_ref.dtype)


@functools.partial(jax.jit, static_argnames=("tb",))
def _mlp_forward_impl(x, w1, b1, w2, b2, w3, b3, *, tb):
    B, _ = x.shape
    n_tiles = pl.cdiv(B, tb)
    Bp = n_tiles * tb

    # bf16 activations/weights for the MXU; biases stay f32.
    x_bf = x.astype(jnp.bfloat16)
    if Bp != B:
        x_bf = jnp.pad(x_bf, ((0, Bp - B), (0, 0)))  # explicit zero pad -> no OOB reads
    w1b, w2b, w3b = (w.astype(jnp.bfloat16) for w in (w1, w2, w3))
    b1f, b2f, b3f = (b.astype(jnp.float32) for b in (b1, b2, b3))

    # Weights / biases: full-array blocks, constant index_map -> resident
    # across all batch tiles (fetched once).
    full = lambda shape: pl.BlockSpec(shape, lambda i: (0,) * len(shape))

    out = pl.pallas_call(
        mlp_kernel,
        out_shape=jax.ShapeDtypeStruct((Bp, D_OUT), jnp.float32),
        grid_spec=pltpu.PrefetchScalarGridSpec(
            num_scalar_prefetch=0,
            grid=(n_tiles,),
            in_specs=[
                pl.BlockSpec((tb, D_IN), lambda i: (i, 0)),
                full((D_IN, D_H)),
                full((1, D_H)),
                full((D_H, D_H)),
                full((1, D_H)),
                full((D_H, D_OUT)),
                full((1, D_OUT)),
            ],
            out_specs=pl.BlockSpec((tb, D_OUT), lambda i: (i, 0)),
            scratch_shapes=[
                pltpu.VMEM((tb, D_H), jnp.bfloat16),  # h1
                pltpu.VMEM((tb, D_H), jnp.bfloat16),  # h2
            ],
        ),
        compiler_params=pltpu.CompilerParams(
            dimension_semantics=("parallel",),
            vmem_limit_bytes=48 * 1024 * 1024,
        ),
    )(x_bf, w1b, b1f, w2b, b2f, w3b, b3f)

    return out[:B]


def mlp_forward(x, w1, b1, w2, b2, w3, b3):
    B = x.shape[0]
    # bf16 sublane-packing minimum is 16 rows; cap at 256 (MXU-friendly tile).
    tb = min(256, ((B + 15) // 16) * 16)
    return _mlp_forward_impl(x, w1, b1, w2, b2, w3, b3, tb=tb)


def init_linear(key, fan_in, fan_out, dtype=jnp.float32):
    # Mimic torch.nn.Linear default init: U(-1/sqrt(fan_in), 1/sqrt(fan_in)).
    kw, kb = jax.random.split(key)
    bound = 1.0 / (fan_in ** 0.5)
    # Stored as (in, out) so the kernel does x @ W.
    w = jax.random.uniform(kw, (fan_in, fan_out), dtype, minval=-bound, maxval=bound)
    b = jax.random.uniform(kb, (1, fan_out), dtype, minval=-bound, maxval=bound)
    return w, b


if __name__ == "__main__":
    key = jax.random.PRNGKey(0)
    kx, k1, k2, k3 = jax.random.split(key, 4)

    B = 8
    x = jax.random.normal(kx, (B, D_IN), jnp.float32)

    w1, b1 = init_linear(k1, D_IN, D_H)
    w2, b2 = init_linear(k2, D_H, D_H)
    w3, b3 = init_linear(k3, D_H, D_OUT)

    out = mlp_forward(x, w1, b1, w2, b2, w3, b3)
    out = jax.block_until_ready(out)

    # Pure-JAX reference mirroring the kernel's numerics
    # (bf16 inputs/weights, f32 accumulation, f32 bias + ReLU).
    xb = x.astype(jnp.bfloat16)
    w1b, w2b, w3b = (w.astype(jnp.bfloat16) for w in (w1, w2, w3))
    h = jnp.maximum(jnp.dot(xb, w1b, preferred_element_type=jnp.float32) + b1, 0.0)
    h = h.astype(jnp.bfloat16)
    h = jnp.maximum(jnp.dot(h, w2b, preferred_element_type=jnp.float32) + b2, 0.0)
    h = h.astype(jnp.bfloat16)
    ref = jnp.dot(h, w3b, preferred_element_type=jnp.float32) + b3

    assert out.shape == (B, D_OUT)
    assert jnp.allclose(out, ref, atol=2e-2, rtol=2e-2), "mismatch vs reference"

    print("KERNEL_OK")
</pallas_src>

<mosaic_0001>
module attributes {stable_mosaic.version = 11 : i64} {
  func.func @mlp_kernel(%arg0: i32, %arg1: memref<16x128xbf16, #tpu.memory_space<vmem>>, %arg2: memref<128x768xbf16, #tpu.memory_space<vmem>>, %arg3: memref<1x768xf32, #tpu.memory_space<vmem>>, %arg4: memref<768x768xbf16, #tpu.memory_space<vmem>>, %arg5: memref<1x768xf32, #tpu.memory_space<vmem>>, %arg6: memref<768x128xbf16, #tpu.memory_space<vmem>>, %arg7: memref<1x128xf32, #tpu.memory_space<vmem>>, %arg8: memref<16x128xf32, #tpu.memory_space<vmem>>, %arg9: memref<16x768xbf16, #tpu.memory_space<vmem>>, %arg10: memref<16x768xbf16, #tpu.memory_space<vmem>>) attributes {dimension_semantics = [#tpu.dimension_semantics<parallel>], iteration_bounds = array<i64: 1>, scalar_prefetch = 0 : i64, scratch_operands = 2 : i64, tpu.core_type = #tpu.core_type<tc>, window_params = [{transform_indices = @transform_0, window_bounds = array<i64: 16, 128>}, {pipeline_mode = #tpu.pipeline_mode<synchronous>, transform_indices = @transform_1, window_bounds = array<i64: 128, 768>}, {pipeline_mode = #tpu.pipeline_mode<synchronous>, transform_indices = @transform_2, window_bounds = array<i64: 1, 768>}, {pipeline_mode = #tpu.pipeline_mode<synchronous>, transform_indices = @transform_3, window_bounds = array<i64: 768, 768>}, {pipeline_mode = #tpu.pipeline_mode<synchronous>, transform_indices = @transform_4, window_bounds = array<i64: 1, 768>}, {pipeline_mode = #tpu.pipeline_mode<synchronous>, transform_indices = @transform_5, window_bounds = array<i64: 768, 128>}, {pipeline_mode = #tpu.pipeline_mode<synchronous>, transform_indices = @transform_6, window_bounds = array<i64: 1, 128>}, {transform_indices = @transform_7, window_bounds = array<i64: 16, 128>}]} {
    %c0 = arith.constant 0 : index
    %c0_0 = arith.constant 0 : index
    %0 = vector.load %arg1[%c0, %c0_0] : memref<16x128xbf16, #tpu.memory_space<vmem>>, vector<16x128xbf16>
    %c0_1 = arith.constant 0 : index
    %c0_2 = arith.constant 0 : index
    %1 = vector.load %arg2[%c0_1, %c0_2] : memref<128x768xbf16, #tpu.memory_space<vmem>>, vector<128x768xbf16>
    %cst = arith.constant dense<0.000000e+00> : vector<16x768xf32>
    %2 = tpu.matmul %0, %1, %cst {dimension_numbers = #tpu.dot_dimension_numbers<[1], [0], [0], [1], [0, 0, 1, 1], [], []>} : vector<16x128xbf16>, vector<128x768xbf16>, vector<16x768xf32> -> vector<16x768xf32>
    %c0_3 = arith.constant 0 : index
    %c0_4 = arith.constant 0 : index
    %3 = vector.load %arg3[%c0_3, %c0_4] : memref<1x768xf32, #tpu.memory_space<vmem>>, vector<1x768xf32>
    %4 = vector.broadcast %3 : vector<1x768xf32> to vector<16x768xf32>
    %5 = arith.addf %2, %4 : vector<16x768xf32>
    %cst_5 = arith.constant 0.000000e+00 : f32
    %6 = vector.broadcast %cst_5 : f32 to vector<16x768xf32>
    %7 = arith.maximumf %5, %6 : vector<16x768xf32>
    %8 = arith.truncf %7 : vector<16x768xf32> to vector<16x768xbf16>
    %c0_6 = arith.constant 0 : index
    %c0_7 = arith.constant 0 : index
    %9 = vector.load %arg9[%c0_6, %c0_7] : memref<16x768xbf16, #tpu.memory_space<vmem>>, vector<16x768xbf16>
    tpu.vector_store %arg9[%c0_6, %c0_7], %8 {strides = array<i32>} : memref<16x768xbf16, #tpu.memory_space<vmem>>, vector<16x768xbf16>,
    %c0_8 = arith.constant 0 : index
    %c0_9 = arith.constant 0 : index
    %10 = vector.load %arg9[%c0_8, %c0_9] : memref<16x768xbf16, #tpu.memory_space<vmem>>, vector<16x768xbf16>
    %c0_10 = arith.constant 0 : index
    %c0_11 = arith.constant 0 : index
    %11 = vector.load %arg4[%c0_10, %c0_11] : memref<768x768xbf16, #tpu.memory_space<vmem>>, vector<768x768xbf16>
    %cst_12 = arith.constant dense<0.000000e+00> : vector<16x768xf32>
    %12 = tpu.matmul %10, %11, %cst_12 {dimension_numbers = #tpu.dot_dimension_numbers<[1], [0], [0], [1], [0, 0, 1, 1], [], []>} : vector<16x768xbf16>, vector<768x768xbf16>, vector<16x768xf32> -> vector<16x768xf32>
    %c0_13 = arith.constant 0 : index
    %c0_14 = arith.constant 0 : index
    %13 = vector.load %arg5[%c0_13, %c0_14] : memref<1x768xf32, #tpu.memory_space<vmem>>, vector<1x768xf32>
    %14 = vector.broadcast %13 : vector<1x768xf32> to vector<16x768xf32>
    %15 = arith.addf %12, %14 : vector<16x768xf32>
    %cst_15 = arith.constant 0.000000e+00 : f32
    %16 = vector.broadcast %cst_15 : f32 to vector<16x768xf32>
    %17 = arith.maximumf %15, %16 : vector<16x768xf32>
    %18 = arith.truncf %17 : vector<16x768xf32> to vector<16x768xbf16>
    %c0_16 = arith.constant 0 : index
    %c0_17 = arith.constant 0 : index
    %19 = vector.load %arg10[%c0_16, %c0_17] : memref<16x768xbf16, #tpu.memory_space<vmem>>, vector<16x768xbf16>
    tpu.vector_store %arg10[%c0_16, %c0_17], %18 {strides = array<i32>} : memref<16x768xbf16, #tpu.memory_space<vmem>>, vector<16x768xbf16>,
    %c0_18 = arith.constant 0 : index
    %c0_19 = arith.constant 0 : index
    %20 = vector.load %arg10[%c0_18, %c0_19] : memref<16x768xbf16, #tpu.memory_space<vmem>>, vector<16x768xbf16>
    %c0_20 = arith.constant 0 : index
    %c0_21 = arith.constant 0 : index
    %21 = vector.load %arg6[%c0_20, %c0_21] : memref<768x128xbf16, #tpu.memory_space<vmem>>, vector<768x128xbf16>
    %cst_22 = arith.constant dense<0.000000e+00> : vector<16x128xf32>
    %22 = tpu.matmul %20, %21, %cst_22 {dimension_numbers = #tpu.dot_dimension_numbers<[1], [0], [0], [1], [0, 0, 1, 1], [], []>} : vector<16x768xbf16>, vector<768x128xbf16>, vector<16x128xf32> -> vector<16x128xf32>
    %c0_23 = arith.constant 0 : index
    %c0_24 = arith.constant 0 : index
    %23 = vector.load %arg7[%c0_23, %c0_24] : memref<1x128xf32, #tpu.memory_space<vmem>>, vector<1x128xf32>
    %24 = vector.broadcast %23 : vector<1x128xf32> to vector<16x128xf32>
    %25 = arith.addf %22, %24 : vector<16x128xf32>
    %c0_25 = arith.constant 0 : index
    %c0_26 = arith.constant 0 : index
    %26 = vector.load %arg8[%c0_25, %c0_26] : memref<16x128xf32, #tpu.memory_space<vmem>>, vector<16x128xf32>
    tpu.vector_store %arg8[%c0_25, %c0_26], %25 {strides = array<i32>} : memref<16x128xf32, #tpu.memory_space<vmem>>, vector<16x128xf32>,
    return
  }
  func.func @transform_0(%arg0: i32) -> (i32, i32) {
    %c0_i32 = arith.constant 0 : i32
    %c0_i32_0 = arith.constant 0 : i32
    return %arg0, %c0_i32 : i32, i32
  }
  func.func @transform_1(%arg0: i32) -> (i32, i32) {
    %c0_i32 = arith.constant 0 : i32
    %c0_i32_0 = arith.constant 0 : i32
    %c0_i32_1 = arith.constant 0 : i32
    return %c0_i32, %c0_i32_0 : i32, i32
  }
  func.func @transform_2(%arg0: i32) -> (i32, i32) {
    %c0_i32 = arith.constant 0 : i32
    %c0_i32_0 = arith.constant 0 : i32
    %c0_i32_1 = arith.constant 0 : i32
    return %c0_i32, %c0_i32_0 : i32, i32
  }
  func.func @transform_3(%arg0: i32) -> (i32, i32) {
    %c0_i32 = arith.constant 0 : i32
    %c0_i32_0 = arith.constant 0 : i32
    %c0_i32_1 = arith.constant 0 : i32
    return %c0_i32, %c0_i32_0 : i32, i32
  }
  func.func @transform_4(%arg0: i32) -> (i32, i32) {
    %c0_i32 = arith.constant 0 : i32
    %c0_i32_0 = arith.constant 0 : i32
    %c0_i32_1 = arith.constant 0 : i32
    return %c0_i32, %c0_i32_0 : i32, i32
  }
  func.func @transform_5(%arg0: i32) -> (i32, i32) {
    %c0_i32 = arith.constant 0 : i32
    %c0_i32_0 = arith.constant 0 : i32
    %c0_i32_1 = arith.constant 0 : i32
    return %c0_i32, %c0_i32_0 : i32, i32
  }
  func.func @transform_6(%arg0: i32) -> (i32, i32) {
    %c0_i32 = arith.constant 0 : i32
    %c0_i32_0 = arith.constant 0 : i32
    %c0_i32_1 = arith.constant 0 : i32
    return %c0_i32, %c0_i32_0 : i32, i32
  }
  func.func @transform_7(%arg0: i32) -> (i32, i32) {
    %c0_i32 = arith.constant 0 : i32
    %c0_i32_0 = arith.constant 0 : i32
    return %arg0, %c0_i32 : i32, i32
  }
}

</mosaic_0001>

<llo_original>
// kernel: _mlp_forward_impl.1
$region0: #{_mlp_forward_impl.1}
  #allocation0 [shape = 'u32[]', space=smem, size = 0x4, offset = 0x4, fixed_abs, tag = 'smem constant byte address 0x4 - core index']
  #allocation1 [shape = 'u32[144,128]{1,0:T(1,128)}', space=vmem, size = 0x12000, scoped, tag = 'internal scratch']
  #allocation2 [shape = 'bf16[16,768]{1,0:T(16,128)(2,1)}', space=vmem, size = 0x6000, scoped, tag = 'scratch operand']
  #allocation3 [shape = 'bf16[16,768]{1,0:T(16,128)(2,1)}', space=vmem, size = 0x6000, scoped, tag = 'scratch operand']
  %s0 = inlined_call_operand.vmem [shape: bf16[16,128], index: 0, kind: input, shape index: {}]
  %s1 = inlined_call_operand.vmem [shape: bf16[128,768], index: 1, kind: input, shape index: {}]
  %s2 = inlined_call_operand.vmem [shape: f32[1,768], index: 2, kind: input, shape index: {}]
  %s3 = inlined_call_operand.vmem [shape: bf16[768,768], index: 3, kind: input, shape index: {}]
  %s4 = inlined_call_operand.vmem [shape: f32[1,768], index: 4, kind: input, shape index: {}]
  %s5 = inlined_call_operand.vmem [shape: bf16[768,128], index: 5, kind: input, shape index: {}]
  %s6 = inlined_call_operand.vmem [shape: f32[1,128], index: 6, kind: input, shape index: {}]
  %s7 = inlined_call_operand.vmem [shape: f32[16,128], index: 7, kind: output, shape index: {}]
  %s8 = sld [smem:[#allocation0]]
  $region38: #{_mlp_forward_impl.1} parent=0
    _
  %s10 = ssub.s32 1, %s8
  %s11 = scalar_select 0, %s10, %s8
  // Predicated region
  $region2: #{_mlp_forward_impl.1} parent=0 // pred_check
    _
  $region3: #{_mlp_forward_impl.1} parent=0 // pred_check_branch
    %13 = sbr.rel (0) target = $region5
  $region4: #{_mlp_forward_impl.1} parent=0 // pred_region
    _
  $region5: #{_mlp_forward_impl.1} parent=0 // pred_fallthru
    _
  // Predicated region
  $region6: #{_mlp_forward_impl.1} parent=0 // pred_check
    _
  $region7: #{_mlp_forward_impl.1} parent=0 // pred_check_branch
    %15 = sbr.rel (0) target = $region9
  $region8: #{_mlp_forward_impl.1} parent=0 // pred_region
    _
  $region9: #{_mlp_forward_impl.1} parent=0 // pred_fallthru
    _
  // Predicated region
  $region10: #{_mlp_forward_impl.1} parent=0 // pred_check
    _
  $region11: #{_mlp_forward_impl.1} parent=0 // pred_check_branch
    %17 = sbr.rel (0) target = $region13
  $region12: #{_mlp_forward_impl.1} parent=0 // pred_region
    _
  $region13: #{_mlp_forward_impl.1} parent=0 // pred_fallthru
    _
  // Predicated region
  $region14: #{_mlp_forward_impl.1} parent=0 // pred_check
    _
  $region15: #{_mlp_forward_impl.1} parent=0 // pred_check_branch
    %19 = sbr.rel (0) target = $region17
  $region16: #{_mlp_forward_impl.1} parent=0 // pred_region
    _
  $region17: #{_mlp_forward_impl.1} parent=0 // pred_fallthru
    _
  // Predicated region
  $region18: #{_mlp_forward_impl.1} parent=0 // pred_check
    _
  $region19: #{_mlp_forward_impl.1} parent=0 // pred_check_branch
    %21 = sbr.rel (0) target = $region21
  $region20: #{_mlp_forward_impl.1} parent=0 // pred_region
    _
  $region21: #{_mlp_forward_impl.1} parent=0 // pred_fallthru
    _
  // Predicated region
  $region22: #{_mlp_forward_impl.1} parent=0 // pred_check
    _
  $region23: #{_mlp_forward_impl.1} parent=0 // pred_check_branch
    %23 = sbr.rel (0) target = $region25
  $region24: #{_mlp_forward_impl.1} parent=0 // pred_region
    _
  $region25: #{_mlp_forward_impl.1} parent=0 // pred_fallthru
    _
  // Predicated region
  $region26: #{_mlp_forward_impl.1} parent=0 // pred_check
    _
  $region27: #{_mlp_forward_impl.1} parent=0 // pred_check_branch
    %25 = sbr.rel (0) target = $region29
  $region28: #{_mlp_forward_impl.1} parent=0 // pred_region
    _
  $region29: #{_mlp_forward_impl.1} parent=0 // pred_fallthru
    _
  %v27 = vld [vmem:[%s0] sm:$0xf]
  %v28 = vld [vmem:[%s0 + $0x4] sm:$0xf]
  %v29 = vld [vmem:[%s1] sm:$0xff]
  %v30 = vld [vmem:[%s1 + $0x8] sm:$0xff]
  %v31 = vld [vmem:[%s1 + $0x10] sm:$0xff]
  %v32 = vld [vmem:[%s1 + $0x18] sm:$0xff]
  %v33 = vld [vmem:[%s1 + $0x20] sm:$0xff]
  %v34 = vld [vmem:[%s1 + $0x28] sm:$0xff]
  %v35 = vld [vmem:[%s1 + $0x30] sm:$0xff]
  %v36 = vld [vmem:[%s1 + $0x38] sm:$0xff]
  %v37 = vld [vmem:[%s1 + $0x40] sm:$0xff]
  %v38 = vld [vmem:[%s1 + $0x48] sm:$0xff]
  %v39 = vld [vmem:[%s1 + $0x50] sm:$0xff]
  %v40 = vld [vmem:[%s1 + $0x58] sm:$0xff]
  %v41 = vld [vmem:[%s1 + $0x60] sm:$0xff]
  %v42 = vld [vmem:[%s1 + $0x68] sm:$0xff]
  %v43 = vld [vmem:[%s1 + $0x70] sm:$0xff]
  %v44 = vld [vmem:[%s1 + $0x78] sm:$0xff]
  %v45 = vld [vmem:[%s1 + $0x80] sm:$0xff]
  %v46 = vld [vmem:[%s1 + $0x88] sm:$0xff]
  %v47 = vld [vmem:[%s1 + $0x90] sm:$0xff]
  %v48 = vld [vmem:[%s1 + $0x98] sm:$0xff]
  %v49 = vld [vmem:[%s1 + $0xa0] sm:$0xff]
  %v50 = vld [vmem:[%s1 + $0xa8] sm:$0xff]
  %v51 = vld [vmem:[%s1 + $0xb0] sm:$0xff]
  %v52 = vld [vmem:[%s1 + $0xb8] sm:$0xff]
  %v53 = vld [vmem:[%s1 + $0xc0] sm:$0xff]
  %v54 = vld [vmem:[%s1 + $0xc8] sm:$0xff]
  %v55 = vld [vmem:[%s1 + $0xd0] sm:$0xff]
  %v56 = vld [vmem:[%s1 + $0xd8] sm:$0xff]
  %v57 = vld [vmem:[%s1 + $0xe0] sm:$0xff]
  %v58 = vld [vmem:[%s1 + $0xe8] sm:$0xff]
  %v59 = vld [vmem:[%s1 + $0xf0] sm:$0xff]
  %v60 = vld [vmem:[%s1 + $0xf8] sm:$0xff]
  %v61 = vld [vmem:[%s1 + $0x100] sm:$0xff]
  %v62 = vld [vmem:[%s1 + $0x108] sm:$0xff]
  %v63 = vld [vmem:[%s1 + $0x110] sm:$0xff]
  %v64 = vld [vmem:[%s1 + $0x118] sm:$0xff]
  %v65 = vld [vmem:[%s1 + $0x120] sm:$0xff]
  %v66 = vld [vmem:[%s1 + $0x128] sm:$0xff]
  %v67 = vld [vmem:[%s1 + $0x130] sm:$0xff]
  %v68 = vld [vmem:[%s1 + $0x138] sm:$0xff]
  %v69 = vld [vmem:[%s1 + $0x140] sm:$0xff]
  %v70 = vld [vmem:[%s1 + $0x148] sm:$0xff]
  %v71 = vld [vmem:[%s1 + $0x150] sm:$0xff]
  %v72 = vld [vmem:[%s1 + $0x158] sm:$0xff]
  %v73 = vld [vmem:[%s1 + $0x160] sm:$0xff]
  %v74 = vld [vmem:[%s1 + $0x168] sm:$0xff]
  %v75 = vld [vmem:[%s1 + $0x170] sm:$0xff]
  %v76 = vld [vmem:[%s1 + $0x178] sm:$0xff]
  %v77 = vld [vmem:[%s2] sm:$0x3f]
  %v79 = vlaneseq
  %v80 = vshrl.u32 %v79, 7
  %v81 = vsub.s32 0, %v80
  %v82 = vrot.slane %v77, %v81
  %v83 = vlaneseq
  %v84 = vshrl.u32 %v83, 7
  %v85 = vsub.s32 1, %v84
  %v86 = vrot.slane %v77, %v85
  %v87 = vlaneseq
  %v88 = vshrl.u32 %v87, 7
  %v89 = vsub.s32 2, %v88
  %v90 = vrot.slane %v77, %v89
  %v91 = vlaneseq
  %v92 = vshrl.u32 %v91, 7
  %v93 = vsub.s32 3, %v92
  %v94 = vrot.slane %v77, %v93
  %v95 = vlaneseq
  %v96 = vshrl.u32 %v95, 7
  %v97 = vsub.s32 4, %v96
  %v98 = vrot.slane %v77, %v97
  %v99 = vlaneseq
  %v100 = vshrl.u32 %v99, 7
  %v101 = vsub.s32 5, %v100
  %v102 = vrot.slane %v77, %v101
  %v111 = vunpack.c.l.b16 %v27
  %v112 = vunpack.c.l.b16 %v28
  %v113 = vpack.c.b16 %v112, %v111
  %v163 = vunpack.c.l.b16 %v29
  %v164 = vunpack.c.h.b16 %v29
  %v165 = vunpack.c.l.b16 %v30
  %v166 = vunpack.c.h.b16 %v30
  %v167 = vunpack.c.l.b16 %v31
  %v168 = vunpack.c.h.b16 %v31
  %v169 = vunpack.c.l.b16 %v32
  %v170 = vunpack.c.h.b16 %v32
  %v171 = vunpack.c.l.b16 %v33
  %v172 = vunpack.c.h.b16 %v33
  %v173 = vunpack.c.l.b16 %v34
  %v174 = vunpack.c.h.b16 %v34
  %v175 = vunpack.c.l.b16 %v35
  %v176 = vunpack.c.h.b16 %v35
  %v177 = vunpack.c.l.b16 %v36
  %v178 = vunpack.c.h.b16 %v36
  %v179 = vunpack.c.l.b16 %v37
  %v180 = vunpack.c.h.b16 %v37
  %v181 = vunpack.c.l.b16 %v38
  %v182 = vunpack.c.h.b16 %v38
  %v183 = vunpack.c.l.b16 %v39
  %v184 = vunpack.c.h.b16 %v39
  %v185 = vunpack.c.l.b16 %v40
  %v186 = vunpack.c.h.b16 %v40
  %v187 = vunpack.c.l.b16 %v41
  %v188 = vunpack.c.h.b16 %v41
  %v189 = vunpack.c.l.b16 %v42
  %v190 = vunpack.c.h.b16 %v42
  %v191 = vunpack.c.l.b16 %v43
  %v192 = vunpack.c.h.b16 %v43
  %v193 = vunpack.c.l.b16 %v44
  %v194 = vunpack.c.h.b16 %v44
  %v195 = vunpack.c.l.b16 %v45
  %v196 = vunpack.c.h.b16 %v45
  %v197 = vunpack.c.l.b16 %v46
  %v198 = vunpack.c.h.b16 %v46
  %v199 = vunpack.c.l.b16 %v47
  %v200 = vunpack.c.h.b16 %v47
  %v201 = vunpack.c.l.b16 %v48
  %v202 = vunpack.c.h.b16 %v48
  %v203 = vunpack.c.l.b16 %v49
  %v204 = vunpack.c.h.b16 %v49
  %v205 = vunpack.c.l.b16 %v50
  %v206 = vunpack.c.h.b16 %v50
  %v207 = vunpack.c.l.b16 %v51
  %v208 = vunpack.c.h.b16 %v51
  %v209 = vunpack.c.l.b16 %v52
  %v210 = vunpack.c.h.b16 %v52
  %v211 = vunpack.c.l.b16 %v53
  %v212 = vunpack.c.h.b16 %v53
  %v213 = vunpack.c.l.b16 %v54
  %v214 = vunpack.c.h.b16 %v54
  %v215 = vunpack.c.l.b16 %v55
  %v216 = vunpack.c.h.b16 %v55
  %v217 = vunpack.c.l.b16 %v56
  %v218 = vunpack.c.h.b16 %v56
  %v219 = vunpack.c.l.b16 %v57
  %v220 = vunpack.c.h.b16 %v57
  %v221 = vunpack.c.l.b16 %v58
  %v222 = vunpack.c.h.b16 %v58
  %v223 = vunpack.c.l.b16 %v59
  %v224 = vunpack.c.h.b16 %v59
  %v225 = vunpack.c.l.b16 %v60
  %v226 = vunpack.c.h.b16 %v60
  %v227 = vunpack.c.l.b16 %v61
  %v228 = vunpack.c.h.b16 %v61
  %v229 = vunpack.c.l.b16 %v62
  %v230 = vunpack.c.h.b16 %v62
  %v231 = vunpack.c.l.b16 %v63
  %v232 = vunpack.c.h.b16 %v63
  %v233 = vunpack.c.l.b16 %v64
  %v234 = vunpack.c.h.b16 %v64
  %v235 = vunpack.c.l.b16 %v65
  %v236 = vunpack.c.h.b16 %v65
  %v237 = vunpack.c.l.b16 %v66
  %v238 = vunpack.c.h.b16 %v66
  %v239 = vunpack.c.l.b16 %v67
  %v240 = vunpack.c.h.b16 %v67
  %v241 = vunpack.c.l.b16 %v68
  %v242 = vunpack.c.h.b16 %v68
  %v243 = vunpack.c.l.b16 %v69
  %v244 = vunpack.c.h.b16 %v69
  %v245 = vunpack.c.l.b16 %v70
  %v246 = vunpack.c.h.b16 %v70
  %v247 = vunpack.c.l.b16 %v71
  %v248 = vunpack.c.h.b16 %v71
  %v249 = vunpack.c.l.b16 %v72
  %v250 = vunpack.c.h.b16 %v72
  %v251 = vunpack.c.l.b16 %v73
  %v252 = vunpack.c.h.b16 %v73
  %v253 = vunpack.c.l.b16 %v74
  %v254 = vunpack.c.h.b16 %v74
  %v255 = vunpack.c.l.b16 %v75
  %v256 = vunpack.c.h.b16 %v75
  %v257 = vunpack.c.l.b16 %v76
  %v258 = vunpack.c.h.b16 %v76
  %v259 = vpack.c.b16 %v169, %v163
  %v260 = vpack.c.b16 %v170, %v164
  %v261 = vpack.c.b16 %v171, %v165
  %v262 = vpack.c.b16 %v172, %v166
  %v263 = vpack.c.b16 %v173, %v167
  %v264 = vpack.c.b16 %v174, %v168
  %v265 = vpack.c.b16 %v181, %v175
  %v266 = vpack.c.b16 %v182, %v176
  %v267 = vpack.c.b16 %v183, %v177
  %v268 = vpack.c.b16 %v184, %v178
  %v269 = vpack.c.b16 %v185, %v179
  %v270 = vpack.c.b16 %v186, %v180
  %v271 = vpack.c.b16 %v193, %v187
  %v272 = vpack.c.b16 %v194, %v188
  %v273 = vpack.c.b16 %v195, %v189
  %v274 = vpack.c.b16 %v196, %v190
  %v275 = vpack.c.b16 %v197, %v191
  %v276 = vpack.c.b16 %v198, %v192
  %v277 = vpack.c.b16 %v205, %v199
  %v278 = vpack.c.b16 %v206, %v200
  %v279 = vpack.c.b16 %v207, %v201
  %v280 = vpack.c.b16 %v208, %v202
  %v281 = vpack.c.b16 %v209, %v203
  %v282 = vpack.c.b16 %v210, %v204
  %v283 = vpack.c.b16 %v217, %v211
  %v284 = vpack.c.b16 %v218, %v212
  %v285 = vpack.c.b16 %v219, %v213
  %v286 = vpack.c.b16 %v220, %v214
  %v287 = vpack.c.b16 %v221, %v215
  %v288 = vpack.c.b16 %v222, %v216
  %v289 = vpack.c.b16 %v229, %v223
  %v290 = vpack.c.b16 %v230, %v224
  %v291 = vpack.c.b16 %v231, %v225
  %v292 = vpack.c.b16 %v232, %v226
  %v293 = vpack.c.b16 %v233, %v227
  %v294 = vpack.c.b16 %v234, %v228
  %v295 = vpack.c.b16 %v241, %v235
  %v296 = vpack.c.b16 %v242, %v236
  %v297 = vpack.c.b16 %v243, %v237
  %v298 = vpack.c.b16 %v244, %v238
  %v299 = vpack.c.b16 %v245, %v239
  %v300 = vpack.c.b16 %v246, %v240
  %v301 = vpack.c.b16 %v253, %v247
  %v302 = vpack.c.b16 %v254, %v248
  %v303 = vpack.c.b16 %v255, %v249
  %v304 = vpack.c.b16 %v256, %v250
  %v305 = vpack.c.b16 %v257, %v251
  %v306 = vpack.c.b16 %v258, %v252
  %355 = vmatprep.subr.bf16.mxu0 %v260
  %356 = vmatpush1.bf16.msra.mxu0 %v259
  %357 = vmatprep.subr.bf16.mxu0 %v266
  %358 = vmatpush1.bf16.msra.mxu0 %v265
  %359 = vmatprep.subr.bf16.mxu0 %v272
  %360 = vmatpush1.bf16.msra.mxu0 %v271
  %361 = vmatprep.subr.bf16.mxu0 %v278
  %362 = vmatpush1.bf16.msra.mxu0 %v277
  %363 = vmatprep.subr.bf16.mxu0 %v284
  %364 = vmatpush1.bf16.msra.mxu0 %v283
  %365 = vmatprep.subr.bf16.mxu0 %v290
  %366 = vmatpush1.bf16.msra.mxu0 %v289
  %367 = vmatprep.subr.bf16.mxu0 %v296
  %368 = vmatpush1.bf16.msra.mxu0 %v295
  %369 = vmatprep.subr.bf16.mxu0 %v302
  %370 = vmatpush1.bf16.msra.mxu0 %v301
  %371 = vmatprep.subr.bf16.mxu0 0
  %372 = vmatpush1.bf16.msra.mxu0 0
  %373 = vmatprep.subr.bf16.mxu0 0
  %374 = vmatpush1.bf16.msra.mxu0 0
  %375 = vmatprep.subr.bf16.mxu0 0
  %376 = vmatpush1.bf16.msra.mxu0 0
  %377 = vmatprep.subr.bf16.mxu0 0
  %378 = vmatpush1.bf16.msra.mxu0 0
  %379 = vmatprep.subr.bf16.mxu0 0
  %380 = vmatpush1.bf16.msra.mxu0 0
  %381 = vmatprep.subr.bf16.mxu0 0
  %382 = vmatpush1.bf16.msra.mxu0 0
  %383 = vmatprep.subr.bf16.mxu0 0
  %384 = vmatpush1.bf16.msra.mxu0 0
  %385 = vmatprep.subr.bf16.mxu0 0
  %386 = vmatpush1.bf16.msra.mxu0 0
  %387 = vmatprep.mubr.bf16.mxu0 0
  %388 = vmatmul.mubr.bf16.gmra.mrb[0].mxu0 %v113
  %v389 = vpop.f32.mrb[0].mxu0
  %v390 = vadd.f32 %v82, %v389
  %v391 = vpop.f32.mrb[0].mxu0
  %v392 = vadd.f32 %v86, %v391
  %v393 = vpop.f32.mrb[0].mxu0
  %v394 = vadd.f32 %v82, %v393
  %v395 = vpop.f32.mrb[0].mxu0
  %v396 = vadd.f32 %v86, %v395
  %397 = vdwg.mxu0
  %398 = vmatprep.subr.bf16.mxu0 %v262
  %399 = vmatpush1.bf16.msra.mxu0 %v261
  %400 = vmatprep.subr.bf16.mxu0 %v268
  %401 = vmatpush1.bf16.msra.mxu0 %v267
  %402 = vmatprep.subr.bf16.mxu0 %v274
  %403 = vmatpush1.bf16.msra.mxu0 %v273
  %404 = vmatprep.subr.bf16.mxu0 %v280
  %405 = vmatpush1.bf16.msra.mxu0 %v279
  %406 = vmatprep.subr.bf16.mxu0 %v286
  %407 = vmatpush1.bf16.msra.mxu0 %v285
  %408 = vmatprep.subr.bf16.mxu0 %v292
  %409 = vmatpush1.bf16.msra.mxu0 %v291
  %410 = vmatprep.subr.bf16.mxu0 %v298
  %411 = vmatpush1.bf16.msra.mxu0 %v297
  %412 = vmatprep.subr.bf16.mxu0 %v304
  %413 = vmatpush1.bf16.msra.mxu0 %v303
  %414 = vmatprep.subr.bf16.mxu0 0
  %415 = vmatpush1.bf16.msra.mxu0 0
  %416 = vmatprep.subr.bf16.mxu0 0
  %417 = vmatpush1.bf16.msra.mxu0 0
  %418 = vmatprep.subr.bf16.mxu0 0
  %419 = vmatpush1.bf16.msra.mxu0 0
  %420 = vmatprep.subr.bf16.mxu0 0
  %421 = vmatpush1.bf16.msra.mxu0 0
  %422 = vmatprep.subr.bf16.mxu0 0
  %423 = vmatpush1.bf16.msra.mxu0 0
  %424 = vmatprep.subr.bf16.mxu0 0
  %425 = vmatpush1.bf16.msra.mxu0 0
  %426 = vmatprep.subr.bf16.mxu0 0
  %427 = vmatpush1.bf16.msra.mxu0 0
  %428 = vmatprep.subr.bf16.mxu0 0
  %429 = vmatpush1.bf16.msra.mxu0 0
  %430 = vmatprep.mubr.bf16.mxu0 0
  %431 = vmatmul.mubr.bf16.gmra.mrb[0].mxu0 %v113
  %v432 = vpop.f32.mrb[0].mxu0
  %v433 = vadd.f32 %v90, %v432
  %v434 = vpop.f32.mrb[0].mxu0
  %v435 = vadd.f32 %v94, %v434
  %v436 = vpop.f32.mrb[0].mxu0
  %v437 = vadd.f32 %v90, %v436
  %v438 = vpop.f32.mrb[0].mxu0
  %v439 = vadd.f32 %v94, %v438
  %440 = vdwg.mxu0
  %441 = vmatprep.subr.bf16.mxu0 %v264
  %442 = vmatpush1.bf16.msra.mxu0 %v263
  %443 = vmatprep.subr.bf16.mxu0 %v270
  %444 = vmatpush1.bf16.msra.mxu0 %v269
  %445 = vmatprep.subr.bf16.mxu0 %v276
  %446 = vmatpush1.bf16.msra.mxu0 %v275
  %447 = vmatprep.subr.bf16.mxu0 %v282
  %448 = vmatpush1.bf16.msra.mxu0 %v281
  %449 = vmatprep.subr.bf16.mxu0 %v288
  %450 = vmatpush1.bf16.msra.mxu0 %v287
  %451 = vmatprep.subr.bf16.mxu0 %v294
  %452 = vmatpush1.bf16.msra.mxu0 %v293
  %453 = vmatprep.subr.bf16.mxu0 %v300
  %454 = vmatpush1.bf16.msra.mxu0 %v299
  %455 = vmatprep.subr.bf16.mxu0 %v306
  %456 = vmatpush1.bf16.msra.mxu0 %v305
  %457 = vmatprep.subr.bf16.mxu0 0
  %458 = vmatpush1.bf16.msra.mxu0 0
  %459 = vmatprep.subr.bf16.mxu0 0
  %460 = vmatpush1.bf16.msra.mxu0 0
  %461 = vmatprep.subr.bf16.mxu0 0
  %462 = vmatpush1.bf16.msra.mxu0 0
  %463 = vmatprep.subr.bf16.mxu0 0
  %464 = vmatpush1.bf16.msra.mxu0 0
  %465 = vmatprep.subr.bf16.mxu0 0
  %466 = vmatpush1.bf16.msra.mxu0 0
  %467 = vmatprep.subr.bf16.mxu0 0
  %468 = vmatpush1.bf16.msra.mxu0 0
  %469 = vmatprep.subr.bf16.mxu0 0
  %470 = vmatpush1.bf16.msra.mxu0 0
  %471 = vmatprep.subr.bf16.mxu0 0
  %472 = vmatpush1.bf16.msra.mxu0 0
  %473 = vmatprep.mubr.bf16.mxu0 0
  %474 = vmatmul.mubr.bf16.gmra.mrb[0].mxu0 %v113
  %v475 = vpop.f32.mrb[0].mxu0
  %v476 = vadd.f32 %v98, %v475
  %v477 = vpop.f32.mrb[0].mxu0
  %v478 = vadd.f32 %v102, %v477
  %v479 = vpop.f32.mrb[0].mxu0
  %v480 = vadd.f32 %v98, %v479
  %v481 = vpop.f32.mrb[0].mxu0
  %v482 = vadd.f32 %v102, %v481
  %483 = vdwg.mxu0
  %v484 = vmax.f32 %v390, 0.0
  %v485 = vmax.f32 %v392, 0.0
  %v486 = vmax.f32 %v433, 0.0
  %v487 = vmax.f32 %v435, 0.0
  %v488 = vmax.f32 %v476, 0.0
  %v489 = vmax.f32 %v478, 0.0
  %v490 = vmax.f32 %v394, 0.0
  %v491 = vmax.f32 %v396, 0.0
  %v492 = vmax.f32 %v437, 0.0
  %v493 = vmax.f32 %v439, 0.0
  %v494 = vmax.f32 %v480, 0.0
  %v495 = vmax.f32 %v482, 0.0
  %v496 = vpack.c.bf16 %v490, %v484
  %v497 = vpack.c.bf16 %v491, %v485
  %v498 = vpack.c.bf16 %v492, %v486
  %v499 = vpack.c.bf16 %v493, %v487
  %v500 = vpack.c.bf16 %v494, %v488
  %v501 = vpack.c.bf16 %v495, %v489
  %502 = vst [vmem:[#allocation2] sm:$0xff] %v496
  %503 = vst [vmem:[#allocation2 + $0x8] sm:$0xff] %v497
  %504 = vst [vmem:[#allocation2 + $0x10] sm:$0xff] %v498
  %505 = vst [vmem:[#allocation2 + $0x18] sm:$0xff] %v499
  %506 = vst [vmem:[#allocation2 + $0x20] sm:$0xff] %v500
  %507 = vst [vmem:[#allocation2 + $0x28] sm:$0xff] %v501
  %v508 = vld [vmem:[#allocation2] sm:$0xff]
  %v509 = vld [vmem:[#allocation2 + $0x8] sm:$0xff]
  %v510 = vld [vmem:[#allocation2 + $0x10] sm:$0xff]
  %v511 = vld [vmem:[#allocation2 + $0x18] sm:$0xff]
  %v512 = vld [vmem:[#allocation2 + $0x20] sm:$0xff]
  %v513 = vld [vmem:[#allocation2 + $0x28] sm:$0xff]
  %v514 = vld [vmem:[%s3] sm:$0xff]
  %v515 = vld [vmem:[%s3 + $0x8] sm:$0xff]
  %v516 = vld [vmem:[%s3 + $0x10] sm:$0xff]
  %v517 = vld [vmem:[%s3 + $0x18] sm:$0xff]
  %v518 = vld [vmem:[%s3 + $0x20] sm:$0xff]
  %v519 = vld [vmem:[%s3 + $0x28] sm:$0xff]
  %v520 = vld [vmem:[%s3 + $0x30] sm:$0xff]
  %v521 = vld [vmem:[%s3 + $0x38] sm:$0xff]
  %v522 = vld [vmem:[%s3 + $0x40] sm:$0xff]
  %v523 = vld [vmem:[%s3 + $0x48] sm:$0xff]
  %v524 = vld [vmem:[%s3 + $0x50] sm:$0xff]
  %v525 = vld [vmem:[%s3 + $0x58] sm:$0xff]
  %v526 = vld [vmem:[%s3 + $0x60] sm:$0xff]
  %v527 = vld [vmem:[%s3 + $0x68] sm:$0xff]
  %v528 = vld [vmem:[%s3 + $0x70] sm:$0xff]
  %v529 = vld [vmem:[%s3 + $0x78] sm:$0xff]
  %v530 = vld [vmem:[%s3 + $0x80] sm:$0xff]
  %v531 = vld [vmem:[%s3 + $0x88] sm:$0xff]
  %v532 = vld [vmem:[%s3 + $0x90] sm:$0xff]
  %v533 = vld [vmem:[%s3 + $0x98] sm:$0xff]
  %v534 = vld [vmem:[%s3 + $0xa0] sm:$0xff]
  %v535 = vld [vmem:[%s3 + $0xa8] sm:$0xff]
  %v536 = vld [vmem:[%s3 + $0xb0] sm:$0xff]
  %v537 = vld [vmem:[%s3 + $0xb8] sm:$0xff]
  %v538 = vld [vmem:[%s3 + $0xc0] sm:$0xff]
  %v539 = vld [vmem:[%s3 + $0xc8] sm:$0xff]
  %v540 = vld [vmem:[%s3 + $0xd0] sm:$0xff]
  %v541 = vld [vmem:[%s3 + $0xd8] sm:$0xff]
  %v542 = vld [vmem:[%s3 + $0xe0] sm:$0xff]
  %v543 = vld [vmem:[%s3 + $0xe8] sm:$0xff]
  %v544 = vld [vmem:[%s3 + $0xf0] sm:$0xff]
  %v545 = vld [vmem:[%s3 + $0xf8] sm:$0xff]
  %v546 = vld [vmem:[%s3 + $0x100] sm:$0xff]
  %v547 = vld [vmem:[%s3 + $0x108] sm:$0xff]
  %v548 = vld [vmem:[%s3 + $0x110] sm:$0xff]
  %v549 = vld [vmem:[%s3 + $0x118] sm:$0xff]
  %v550 = vld [vmem:[%s3 + $0x120] sm:$0xff]
  %v551 = vld [vmem:[%s3 + $0x128] sm:$0xff]
  %v552 = vld [vmem:[%s3 + $0x130] sm:$0xff]
  %v553 = vld [vmem:[%s3 + $0x138] sm:$0xff]
  %v554 = vld [vmem:[%s3 + $0x140] sm:$0xff]
  %v555 = vld [vmem:[%s3 + $0x148] sm:$0xff]
  %v556 = vld [vmem:[%s3 + $0x150] sm:$0xff]
  %v557 = vld [vmem:[%s3 + $0x158] sm:$0xff]
  %v558 = vld [vmem:[%s3 + $0x160] sm:$0xff]
  %v559 = vld [vmem:[%s3 + $0x168] sm:$0xff]
  %v560 = vld [vmem:[%s3 + $0x170] sm:$0xff]
  %v561 = vld [vmem:[%s3 + $0x178] sm:$0xff]
  %v562 = vld [vmem:[%s3 + $0x180] sm:$0xff]
  %v563 = vld [vmem:[%s3 + $0x188] sm:$0xff]
  %v564 = vld [vmem:[%s3 + $0x190] sm:$0xff]
  %v565 = vld [vmem:[%s3 + $0x198] sm:$0xff]
  %v566 = vld [vmem:[%s3 + $0x1a0] sm:$0xff]
  %v567 = vld [vmem:[%s3 + $0x1a8] sm:$0xff]
  %v568 = vld [vmem:[%s3 + $0x1b0] sm:$0xff]
  %v569 = vld [vmem:[%s3 + $0x1b8] sm:$0xff]
  %v570 = vld [vmem:[%s3 + $0x1c0] sm:$0xff]
  %v571 = vld [vmem:[%s3 + $0x1c8] sm:$0xff]
  %v572 = vld [vmem:[%s3 + $0x1d0] sm:$0xff]
  %v573 = vld [vmem:[%s3 + $0x1d8] sm:$0xff]
  %v574 = vld [vmem:[%s3 + $0x1e0] sm:$0xff]
  %v575 = vld [vmem:[%s3 + $0x1e8] sm:$0xff]
  %v576 = vld [vmem:[%s3 + $0x1f0] sm:$0xff]
  %v577 = vld [vmem:[%s3 + $0x1f8] sm:$0xff]
  %v578 = vld [vmem:[%s3 + $0x200] sm:$0xff]
  %v579 = vld [vmem:[%s3 + $0x208] sm:$0xff]
  %v580 = vld [vmem:[%s3 + $0x210] sm:$0xff]
  %v581 = vld [vmem:[%s3 + $0x218] sm:$0xff]
  %v582 = vld [vmem:[%s3 + $0x220] sm:$0xff]
  %v583 = vld [vmem:[%s3 + $0x228] sm:$0xff]
  %v584 = vld [vmem:[%s3 + $0x230] sm:$0xff]
  %v585 = vld [vmem:[%s3 + $0x238] sm:$0xff]
  %v586 = vld [vmem:[%s3 + $0x240] sm:$0xff]
  %v587 = vld [vmem:[%s3 + $0x248] sm:$0xff]
  %v588 = vld [vmem:[%s3 + $0x250] sm:$0xff]
  %v589 = vld [vmem:[%s3 + $0x258] sm:$0xff]
  %v590 = vld [vmem:[%s3 + $0x260] sm:$0xff]
  %v591 = vld [vmem:[%s3 + $0x268] sm:$0xff]
  %v592 = vld [vmem:[%s3 + $0x270] sm:$0xff]
  %v593 = vld [vmem:[%s3 + $0x278] sm:$0xff]
  %v594 = vld [vmem:[%s3 + $0x280] sm:$0xff]
  %v595 = vld [vmem:[%s3 + $0x288] sm:$0xff]
  %v596 = vld [vmem:[%s3 + $0x290] sm:$0xff]
  %v597 = vld [vmem:[%s3 + $0x298] sm:$0xff]
  %v598 = vld [vmem:[%s3 + $0x2a0] sm:$0xff]
  %v599 = vld [vmem:[%s3 + $0x2a8] sm:$0xff]
  %v600 = vld [vmem:[%s3 + $0x2b0] sm:$0xff]
  %v601 = vld [vmem:[%s3 + $0x2b8] sm:$0xff]
  %v602 = vld [vmem:[%s3 + $0x2c0] sm:$0xff]
  %v603 = vld [vmem:[%s3 + $0x2c8] sm:$0xff]
  %v604 = vld [vmem:[%s3 + $0x2d0] sm:$0xff]
  %v605 = vld [vmem:[%s3 + $0x2d8] sm:$0xff]
  %v606 = vld [vmem:[%s3 + $0x2e0] sm:$0xff]
  %v607 = vld [vmem:[%s3 + $0x2e8] sm:$0xff]
  %v608 = vld [vmem:[%s3 + $0x2f0] sm:$0xff]
  %v609 = vld [vmem:[%s3 + $0x2f8] sm:$0xff]
  %v610 = vld [vmem:[%s3 + $0x300] sm:$0xff]
  %v611 = vld [vmem:[%s3 + $0x308] sm:$0xff]
  %v612 = vld [vmem:[%s3 + $0x310] sm:$0xff]
  %v613 = vld [vmem:[%s3 + $0x318] sm:$0xff]
  %v614 = vld [vmem:[%s3 + $0x320] sm:$0xff]
  %v615 = vld [vmem:[%s3 + $0x328] sm:$0xff]
  %v616 = vld [vmem:[%s3 + $0x330] sm:$0xff]
  %v617 = vld [vmem:[%s3 + $0x338] sm:$0xff]
  %v618 = vld [vmem:[%s3 + $0x340] sm:$0xff]
  %v619 = vld [vmem:[%s3 + $0x348] sm:$0xff]
  %v620 = vld [vmem:[%s3 + $0x350] sm:$0xff]
  %v621 = vld [vmem:[%s3 + $0x358] sm:$0xff]
  %v622 = vld [vmem:[%s3 + $0x360] sm:$0xff]
  %v623 = vld [vmem:[%s3 + $0x368] sm:$0xff]
  %v624 = vld [vmem:[%s3 + $0x370] sm:$0xff]
  %v625 = vld [vmem:[%s3 + $0x378] sm:$0xff]
  %v626 = vld [vmem:[%s3 + $0x380] sm:$0xff]
  %v627 = vld [vmem:[%s3 + $0x388] sm:$0xff]
  %v628 = vld [vmem:[%s3 + $0x390] sm:$0xff]
  %v629 = vld [vmem:[%s3 + $0x398] sm:$0xff]
  %v630 = vld [vmem:[%s3 + $0x3a0] sm:$0xff]
  %v631 = vld [vmem:[%s3 + $0x3a8] sm:$0xff]
  %v632 = vld [vmem:[%s3 + $0x3b0] sm:$0xff]
  %v633 = vld [vmem:[%s3 + $0x3b8] sm:$0xff]
  %v634 = vld [vmem:[%s3 + $0x3c0] sm:$0xff]
  %v635 = vld [vmem:[%s3 + $0x3c8] sm:$0xff]
  %v636 = vld [vmem:[%s3 + $0x3d0] sm:$0xff]
  %v637 = vld [vmem:[%s3 + $0x3d8] sm:$0xff]
  %v638 = vld [vmem:[%s3 + $0x3e0] sm:$0xff]
  %v639 = vld [vmem:[%s3 + $0x3e8] sm:$0xff]
  %v640 = vld [vmem:[%s3 + $0x3f0] sm:$0xff]
  %v641 = vld [vmem:[%s3 + $0x3f8] sm:$0xff]
  %v642 = vld [vmem:[%s3 + $0x400] sm:$0xff]
  %v643 = vld [vmem:[%s3 + $0x408] sm:$0xff]
  %v644 = vld [vmem:[%s3 + $0x410] sm:$0xff]
  %v645 = vld [vmem:[%s3 + $0x418] sm:$0xff]
  %v646 = vld [vmem:[%s3 + $0x420] sm:$0xff]
  %v647 = vld [vmem:[%s3 + $0x428] sm:$0xff]
  %v648 = vld [vmem:[%s3 + $0x430] sm:$0xff]
  %v649 = vld [vmem:[%s3 + $0x438] sm:$0xff]
  %v650 = vld [vmem:[%s3 + $0x440] sm:$0xff]
  %v651 = vld [vmem:[%s3 + $0x448] sm:$0xff]
  %v652 = vld [vmem:[%s3 + $0x450] sm:$0xff]
  %v653 = vld [vmem:[%s3 + $0x458] sm:$0xff]
  %v654 = vld [vmem:[%s3 + $0x460] sm:$0xff]
  %v655 = vld [vmem:[%s3 + $0x468] sm:$0xff]
  %v656 = vld [vmem:[%s3 + $0x470] sm:$0xff]
  %v657 = vld [vmem:[%s3 + $0x478] sm:$0xff]
  %v658 = vld [vmem:[%s3 + $0x480] sm:$0xff]
  %v659 = vld [vmem:[%s3 + $0x488] sm:$0xff]
  %v660 = vld [vmem:[%s3 + $0x490] sm:$0xff]
  %v661 = vld [vmem:[%s3 + $0x498] sm:$0xff]
  %v662 = vld [vmem:[%s3 + $0x4a0] sm:$0xff]
  %v663 = vld [vmem:[%s3 + $0x4a8] sm:$0xff]
  %v664 = vld [vmem:[%s3 + $0x4b0] sm:$0xff]
  %v665 = vld [vmem:[%s3 + $0x4b8] sm:$0xff]
  %v666 = vld [vmem:[%s3 + $0x4c0] sm:$0xff]
  %v667 = vld [vmem:[%s3 + $0x4c8] sm:$0xff]
  %v668 = vld [vmem:[%s3 + $0x4d0] sm:$0xff]
  %v669 = vld [vmem:[%s3 + $0x4d8] sm:$0xff]
  %v670 = vld [vmem:[%s3 + $0x4e0] sm:$0xff]
  %v671 = vld [vmem:[%s3 + $0x4e8] sm:$0xff]
  %v672 = vld [vmem:[%s3 + $0x4f0] sm:$0xff]
  %v673 = vld [vmem:[%s3 + $0x4f8] sm:$0xff]
  %v674 = vld [vmem:[%s3 + $0x500] sm:$0xff]
  %v675 = vld [vmem:[%s3 + $0x508] sm:$0xff]
  %v676 = vld [vmem:[%s3 + $0x510] sm:$0xff]
  %v677 = vld [vmem:[%s3 + $0x518] sm:$0xff]
  %v678 = vld [vmem:[%s3 + $0x520] sm:$0xff]
  %v679 = vld [vmem:[%s3 + $0x528] sm:$0xff]
  %v680 = vld [vmem:[%s3 + $0x530] sm:$0xff]
  %v681 = vld [vmem:[%s3 + $0x538] sm:$0xff]
  %v682 = vld [vmem:[%s3 + $0x540] sm:$0xff]
  %v683 = vld [vmem:[%s3 + $0x548] sm:$0xff]
  %v684 = vld [vmem:[%s3 + $0x550] sm:$0xff]
  %v685 = vld [vmem:[%s3 + $0x558] sm:$0xff]
  %v686 = vld [vmem:[%s3 + $0x560] sm:$0xff]
  %v687 = vld [vmem:[%s3 + $0x568] sm:$0xff]
  %v688 = vld [vmem:[%s3 + $0x570] sm:$0xff]
  %v689 = vld [vmem:[%s3 + $0x578] sm:$0xff]
  %v690 = vld [vmem:[%s3 + $0x580] sm:$0xff]
  %v691 = vld [vmem:[%s3 + $0x588] sm:$0xff]
  %v692 = vld [vmem:[%s3 + $0x590] sm:$0xff]
  %v693 = vld [vmem:[%s3 + $0x598] sm:$0xff]
  %v694 = vld [vmem:[%s3 + $0x5a0] sm:$0xff]
  %v695 = vld [vmem:[%s3 + $0x5a8] sm:$0xff]
  %v696 = vld [vmem:[%s3 + $0x5b0] sm:$0xff]
  %v697 = vld [vmem:[%s3 + $0x5b8] sm:$0xff]
  %v698 = vld [vmem:[%s3 + $0x5c0] sm:$0xff]
  %v699 = vld [vmem:[%s3 + $0x5c8] sm:$0xff]
  %v700 = vld [vmem:[%s3 + $0x5d0] sm:$0xff]
  %v701 = vld [vmem:[%s3 + $0x5d8] sm:$0xff]
  %v702 = vld [vmem:[%s3 + $0x5e0] sm:$0xff]
  %v703 = vld [vmem:[%s3 + $0x5e8] sm:$0xff]
  %v704 = vld [vmem:[%s3 + $0x5f0] sm:$0xff]
  %v705 = vld [vmem:[%s3 + $0x5f8] sm:$0xff]
  %v706 = vld [vmem:[%s3 + $0x600] sm:$0xff]
  %v707 = vld [vmem:[%s3 + $0x608] sm:$0xff]
  %v708 = vld [vmem:[%s3 + $0x610] sm:$0xff]
  %v709 = vld [vmem:[%s3 + $0x618] sm:$0xff]
  %v710 = vld [vmem:[%s3 + $0x620] sm:$0xff]
  %v711 = vld [vmem:[%s3 + $0x628] sm:$0xff]
  %v712 = vld [vmem:[%s3 + $0x630] sm:$0xff]
  %v713 = vld [vmem:[%s3 + $0x638] sm:$0xff]
  %v714 = vld [vmem:[%s3 + $0x640] sm:$0xff]
  %v715 = vld [vmem:[%s3 + $0x648] sm:$0xff]
  %v716 = vld [vmem:[%s3 + $0x650] sm:$0xff]
  %v717 = vld [vmem:[%s3 + $0x658] sm:$0xff]
  %v718 = vld [vmem:[%s3 + $0x660] sm:$0xff]
  %v719 = vld [vmem:[%s3 + $0x668] sm:$0xff]
  %v720 = vld [vmem:[%s3 + $0x670] sm:$0xff]
  %v721 = vld [vmem:[%s3 + $0x678] sm:$0xff]
  %v722 = vld [vmem:[%s3 + $0x680] sm:$0xff]
  %v723 = vld [vmem:[%s3 + $0x688] sm:$0xff]
  %v724 = vld [vmem:[%s3 + $0x690] sm:$0xff]
  %v725 = vld [vmem:[%s3 + $0x698] sm:$0xff]
  %v726 = vld [vmem:[%s3 + $0x6a0] sm:$0xff]
  %v727 = vld [vmem:[%s3 + $0x6a8] sm:$0xff]
  %v728 = vld [vmem:[%s3 + $0x6b0] sm:$0xff]
  %v729 = vld [vmem:[%s3 + $0x6b8] sm:$0xff]
  %v730 = vld [vmem:[%s3 + $0x6c0] sm:$0xff]
  %v731 = vld [vmem:[%s3 + $0x6c8] sm:$0xff]
  %v732 = vld [vmem:[%s3 + $0x6d0] sm:$0xff]
  %v733 = vld [vmem:[%s3 + $0x6d8] sm:$0xff]
  %v734 = vld [vmem:[%s3 + $0x6e0] sm:$0xff]
  %v735 = vld [vmem:[%s3 + $0x6e8] sm:$0xff]
  %v736 = vld [vmem:[%s3 + $0x6f0] sm:$0xff]
  %v737 = vld [vmem:[%s3 + $0x6f8] sm:$0xff]
  %v738 = vld [vmem:[%s3 + $0x700] sm:$0xff]
  %v739 = vld [vmem:[%s3 + $0x708] sm:$0xff]
  %v740 = vld [vmem:[%s3 + $0x710] sm:$0xff]
  %v741 = vld [vmem:[%s3 + $0x718] sm:$0xff]
  %v742 = vld [vmem:[%s3 + $0x720] sm:$0xff]
  %v743 = vld [vmem:[%s3 + $0x728] sm:$0xff]
  %v744 = vld [vmem:[%s3 + $0x730] sm:$0xff]
  %v745 = vld [vmem:[%s3 + $0x738] sm:$0xff]
  %v746 = vld [vmem:[%s3 + $0x740] sm:$0xff]
  %v747 = vld [vmem:[%s3 + $0x748] sm:$0xff]
  %v748 = vld [vmem:[%s3 + $0x750] sm:$0xff]
  %v749 = vld [vmem:[%s3 + $0x758] sm:$0xff]
  %v750 = vld [vmem:[%s3 + $0x760] sm:$0xff]
  %v751 = vld [vmem:[%s3 + $0x768] sm:$0xff]
  %v752 = vld [vmem:[%s3 + $0x770] sm:$0xff]
  %v753 = vld [vmem:[%s3 + $0x778] sm:$0xff]
  %v754 = vld [vmem:[%s3 + $0x780] sm:$0xff]
  %v755 = vld [vmem:[%s3 + $0x788] sm:$0xff]
  %v756 = vld [vmem:[%s3 + $0x790] sm:$0xff]
  %v757 = vld [vmem:[%s3 + $0x798] sm:$0xff]
  %v758 = vld [vmem:[%s3 + $0x7a0] sm:$0xff]
  %v759 = vld [vmem:[%s3 + $0x7a8] sm:$0xff]
  %v760 = vld [vmem:[%s3 + $0x7b0] sm:$0xff]
  %v761 = vld [vmem:[%s3 + $0x7b8] sm:$0xff]
  %v762 = vld [vmem:[%s3 + $0x7c0] sm:$0xff]
  %v763 = vld [vmem:[%s3 + $0x7c8] sm:$0xff]
  %v764 = vld [vmem:[%s3 + $0x7d0] sm:$0xff]
  %v765 = vld [vmem:[%s3 + $0x7d8] sm:$0xff]
  %v766 = vld [vmem:[%s3 + $0x7e0] sm:$0xff]
  %v767 = vld [vmem:[%s3 + $0x7e8] sm:$0xff]
  %v768 = vld [vmem:[%s3 + $0x7f0] sm:$0xff]
  %v769 = vld [vmem:[%s3 + $0x7f8] sm:$0xff]
  %v770 = vld [vmem:[%s3 + $0x800] sm:$0xff]
  %v771 = vld [vmem:[%s3 + $0x808] sm:$0xff]
  %v772 = vld [vmem:[%s3 + $0x810] sm:$0xff]
  %v773 = vld [vmem:[%s3 + $0x818] sm:$0xff]
  %v774 = vld [vmem:[%s3 + $0x820] sm:$0xff]
  %v775 = vld [vmem:[%s3 + $0x828] sm:$0xff]
  %v776 = vld [vmem:[%s3 + $0x830] sm:$0xff]
  %v777 = vld [vmem:[%s3 + $0x838] sm:$0xff]
  %v778 = vld [vmem:[%s3 + $0x840] sm:$0xff]
  %v779 = vld [vmem:[%s3 + $0x848] sm:$0xff]
  %v780 = vld [vmem:[%s3 + $0x850] sm:$0xff]
  %v781 = vld [vmem:[%s3 + $0x858] sm:$0xff]
  %v782 = vld [vmem:[%s3 + $0x860] sm:$0xff]
  %v783 = vld [vmem:[%s3 + $0x868] sm:$0xff]
  %v784 = vld [vmem:[%s3 + $0x870] sm:$0xff]
  %v785 = vld [vmem:[%s3 + $0x878] sm:$0xff]
  %v786 = vld [vmem:[%s3 + $0x880] sm:$0xff]
  %v787 = vld [vmem:[%s3 + $0x888] sm:$0xff]
  %v788 = vld [vmem:[%s3 + $0x890] sm:$0xff]
  %v789 = vld [vmem:[%s3 + $0x898] sm:$0xff]
  %v790 = vld [vmem:[%s3 + $0x8a0] sm:$0xff]
  %v791 = vld [vmem:[%s3 + $0x8a8] sm:$0xff]
  %v792 = vld [vmem:[%s3 + $0x8b0] sm:$0xff]
  %v793 = vld [vmem:[%s3 + $0x8b8] sm:$0xff]
  %v794 = vld [vmem:[%s3 + $0x8c0] sm:$0xff]
  %v795 = vld [vmem:[%s3 + $0x8c8] sm:$0xff]
  %v796 = vld [vmem:[%s3 + $0x8d0] sm:$0xff]
  %v797 = vld [vmem:[%s3 + $0x8d8] sm:$0xff]
  %v798 = vld [vmem:[%s3 + $0x8e0] sm:$0xff]
  %v799 = vld [vmem:[%s3 + $0x8e8] sm:$0xff]
  %v800 = vld [vmem:[%s3 + $0x8f0] sm:$0xff]
  %v801 = vld [vmem:[%s3 + $0x8f8] sm:$0xff]
  %v802 = vld [vmem:[%s4] sm:$0x3f]
  %v804 = vlaneseq
  %v805 = vshrl.u32 %v804, 7
  %v806 = vsub.s32 0, %v805
  %v807 = vrot.slane %v802, %v806
  %v808 = vlaneseq
  %v809 = vshrl.u32 %v808, 7
  %v810 = vsub.s32 1, %v809
  %v811 = vrot.slane %v802, %v810
  %v812 = vlaneseq
  %v813 = vshrl.u32 %v812, 7
  %v814 = vsub.s32 2, %v813
  %v815 = vrot.slane %v802, %v814
  %v816 = vlaneseq
  %v817 = vshrl.u32 %v816, 7
  %v818 = vsub.s32 3, %v817
  %v819 = vrot.slane %v802, %v818
  %v820 = vlaneseq
  %v821 = vshrl.u32 %v820, 7
  %v822 = vsub.s32 4, %v821
  %v823 = vrot.slane %v802, %v822
  %v824 = vlaneseq
  %v825 = vshrl.u32 %v824, 7
  %v826 = vsub.s32 5, %v825
  %v827 = vrot.slane %v802, %v826
  %v1122 = vunpack.c.l.b16 %v514
  %v1123 = vunpack.c.h.b16 %v514
  %v1124 = vunpack.c.l.b16 %v515
  %v1125 = vunpack.c.h.b16 %v515
  %v1126 = vunpack.c.l.b16 %v516
  %v1127 = vunpack.c.h.b16 %v516
  %v1128 = vunpack.c.l.b16 %v517
  %v1129 = vunpack.c.h.b16 %v517
  %v1130 = vunpack.c.l.b16 %v518
  %v1131 = vunpack.c.h.b16 %v518
  %v1132 = vunpack.c.l.b16 %v519
  %v1133 = vunpack.c.h.b16 %v519
  %v1134 = vunpack.c.l.b16 %v520
  %v1135 = vunpack.c.h.b16 %v520
  %v1136 = vunpack.c.l.b16 %v521
  %v1137 = vunpack.c.h.b16 %v521
  %v1138 = vunpack.c.l.b16 %v522
  %v1139 = vunpack.c.h.b16 %v522
  %v1140 = vunpack.c.l.b16 %v523
  %v1141 = vunpack.c.h.b16 %v523
  %v1142 = vunpack.c.l.b16 %v524
  %v1143 = vunpack.c.h.b16 %v524
  %v1144 = vunpack.c.l.b16 %v525
  %v1145 = vunpack.c.h.b16 %v525
  %v1146 = vunpack.c.l.b16 %v526
  %v1147 = vunpack.c.h.b16 %v526
  %v1148 = vunpack.c.l.b16 %v527
  %v1149 = vunpack.c.h.b16 %v527
  %v1150 = vunpack.c.l.b16 %v528
  %v1151 = vunpack.c.h.b16 %v528
  %v1152 = vunpack.c.l.b16 %v529
  %v1153 = vunpack.c.h.b16 %v529
  %v1154 = vunpack.c.l.b16 %v530
  %v1155 = vunpack.c.h.b16 %v530
  %v1156 = vunpack.c.l.b16 %v531
  %v1157 = vunpack.c.h.b16 %v531
  %v1158 = vunpack.c.l.b16 %v532
  %v1159 = vunpack.c.h.b16 %v532
  %v1160 = vunpack.c.l.b16 %v533
  %v1161 = vunpack.c.h.b16 %v533
  %v1162 = vunpack.c.l.b16 %v534
  %v1163 = vunpack.c.h.b16 %v534
  %v1164 = vunpack.c.l.b16 %v535
  %v1165 = vunpack.c.h.b16 %v535
  %v1166 = vunpack.c.l.b16 %v536
  %v1167 = vunpack.c.h.b16 %v536
  %v1168 = vunpack.c.l.b16 %v537
  %v1169 = vunpack.c.h.b16 %v537
  %v1170 = vunpack.c.l.b16 %v538
  %v1171 = vunpack.c.h.b16 %v538
  %v1172 = vunpack.c.l.b16 %v539
  %v1173 = vunpack.c.h.b16 %v539
  %v1174 = vunpack.c.l.b16 %v540
  %v1175 = vunpack.c.h.b16 %v540
  %v1176 = vunpack.c.l.b16 %v541
  %v1177 = vunpack.c.h.b16 %v541
  %v1178 = vunpack.c.l.b16 %v542
  %v1179 = vunpack.c.h.b16 %v542
  %v1180 = vunpack.c.l.b16 %v543
  %v1181 = vunpack.c.h.b16 %v543
  %v1182 = vunpack.c.l.b16 %v544
  %v1183 = vunpack.c.h.b16 %v544
  %v1184 = vunpack.c.l.b16 %v545
  %v1185 = vunpack.c.h.b16 %v545
  %v1186 = vunpack.c.l.b16 %v546
  %v1187 = vunpack.c.h.b16 %v546
  %v1188 = vunpack.c.l.b16 %v547
  %v1189 = vunpack.c.h.b16 %v547
  %v1190 = vunpack.c.l.b16 %v548
  %v1191 = vunpack.c.h.b16 %v548
  %v1192 = vunpack.c.l.b16 %v549
  %v1193 = vunpack.c.h.b16 %v549
  %v1194 = vunpack.c.l.b16 %v550
  %v1195 = vunpack.c.h.b16 %v550
  %v1196 = vunpack.c.l.b16 %v551
  %v1197 = vunpack.c.h.b16 %v551
  %v1198 = vunpack.c.l.b16 %v552
  %v1199 = vunpack.c.h.b16 %v552
  %v1200 = vunpack.c.l.b16 %v553
  %v1201 = vunpack.c.h.b16 %v553
  %v1202 = vunpack.c.l.b16 %v554
  %v1203 = vunpack.c.h.b16 %v554
  %v1204 = vunpack.c.l.b16 %v555
  %v1205 = vunpack.c.h.b16 %v555
  %v1206 = vunpack.c.l.b16 %v556
  %v1207 = vunpack.c.h.b16 %v556
  %v1208 = vunpack.c.l.b16 %v557
  %v1209 = vunpack.c.h.b16 %v557
  %v1210 = vunpack.c.l.b16 %v558
  %v1211 = vunpack.c.h.b16 %v558
  %v1212 = vunpack.c.l.b16 %v559
  %v1213 = vunpack.c.h.b16 %v559
  %v1214 = vunpack.c.l.b16 %v560
  %v1215 = vunpack.c.h.b16 %v560
  %v1216 = vunpack.c.l.b16 %v561
  %v1217 = vunpack.c.h.b16 %v561
  %v1218 = vunpack.c.l.b16 %v562
  %v1219 = vunpack.c.h.b16 %v562
  %v1220 = vunpack.c.l.b16 %v563
  %v1221 = vunpack.c.h.b16 %v563
  %v1222 = vunpack.c.l.b16 %v564
  %v1223 = vunpack.c.h.b16 %v564
  %v1224 = vunpack.c.l.b16 %v565
  %v1225 = vunpack.c.h.b16 %v565
  %v1226 = vunpack.c.l.b16 %v566
  %v1227 = vunpack.c.h.b16 %v566
  %v1228 = vunpack.c.l.b16 %v567
  %v1229 = vunpack.c.h.b16 %v567
  %v1230 = vunpack.c.l.b16 %v568
  %v1231 = vunpack.c.h.b16 %v568
  %v1232 = vunpack.c.l.b16 %v569
  %v1233 = vunpack.c.h.b16 %v569
  %v1234 = vunpack.c.l.b16 %v570
  %v1235 = vunpack.c.h.b16 %v570
  %v1236 = vunpack.c.l.b16 %v571
  %v1237 = vunpack.c.h.b16 %v571
  %v1238 = vunpack.c.l.b16 %v572
  %v1239 = vunpack.c.h.b16 %v572
  %v1240 = vunpack.c.l.b16 %v573
  %v1241 = vunpack.c.h.b16 %v573
  %v1242 = vunpack.c.l.b16 %v574
  %v1243 = vunpack.c.h.b16 %v574
  %v1244 = vunpack.c.l.b16 %v575
  %v1245 = vunpack.c.h.b16 %v575
  %v1246 = vunpack.c.l.b16 %v576
  %v1247 = vunpack.c.h.b16 %v576
  %v1248 = vunpack.c.l.b16 %v577
  %v1249 = vunpack.c.h.b16 %v577
  %v1250 = vunpack.c.l.b16 %v578
  %v1251 = vunpack.c.h.b16 %v578
  %v1252 = vunpack.c.l.b16 %v579
  %v1253 = vunpack.c.h.b16 %v579
  %v1254 = vunpack.c.l.b16 %v580
  %v1255 = vunpack.c.h.b16 %v580
  %v1256 = vunpack.c.l.b16 %v581
  %v1257 = vunpack.c.h.b16 %v581
  %v1258 = vunpack.c.l.b16 %v582
  %v1259 = vunpack.c.h.b16 %v582
  %v1260 = vunpack.c.l.b16 %v583
  %v1261 = vunpack.c.h.b16 %v583
  %v1262 = vunpack.c.l.b16 %v584
  %v1263 = vunpack.c.h.b16 %v584
  %v1264 = vunpack.c.l.b16 %v585
  %v1265 = vunpack.c.h.b16 %v585
  %v1266 = vunpack.c.l.b16 %v586
  %v1267 = vunpack.c.h.b16 %v586
  %v1268 = vunpack.c.l.b16 %v587
  %v1269 = vunpack.c.h.b16 %v587
  %v1270 = vunpack.c.l.b16 %v588
  %v1271 = vunpack.c.h.b16 %v588
  %v1272 = vunpack.c.l.b16 %v589
  %v1273 = vunpack.c.h.b16 %v589
  %v1274 = vunpack.c.l.b16 %v590
  %v1275 = vunpack.c.h.b16 %v590
  %v1276 = vunpack.c.l.b16 %v591
  %v1277 = vunpack.c.h.b16 %v591
  %v1278 = vunpack.c.l.b16 %v592
  %v1279 = vunpack.c.h.b16 %v592
  %v1280 = vunpack.c.l.b16 %v593
  %v1281 = vunpack.c.h.b16 %v593
  %v1282 = vunpack.c.l.b16 %v594
  %v1283 = vunpack.c.h.b16 %v594
  %v1284 = vunpack.c.l.b16 %v595
  %v1285 = vunpack.c.h.b16 %v595
  %v1286 = vunpack.c.l.b16 %v596
  %v1287 = vunpack.c.h.b16 %v596
  %v1288 = vunpack.c.l.b16 %v597
  %v1289 = vunpack.c.h.b16 %v597
  %v1290 = vunpack.c.l.b16 %v598
  %v1291 = vunpack.c.h.b16 %v598
  %v1292 = vunpack.c.l.b16 %v599
  %v1293 = vunpack.c.h.b16 %v599
  %v1294 = vunpack.c.l.b16 %v600
  %v1295 = vunpack.c.h.b16 %v600
  %v1296 = vunpack.c.l.b16 %v601
  %v1297 = vunpack.c.h.b16 %v601
  %v1298 = vunpack.c.l.b16 %v602
  %v1299 = vunpack.c.h.b16 %v602
  %v1300 = vunpack.c.l.b16 %v603
  %v1301 = vunpack.c.h.b16 %v603
  %v1302 = vunpack.c.l.b16 %v604
  %v1303 = vunpack.c.h.b16 %v604
  %v1304 = vunpack.c.l.b16 %v605
  %v1305 = vunpack.c.h.b16 %v605
  %v1306 = vunpack.c.l.b16 %v606
  %v1307 = vunpack.c.h.b16 %v606
  %v1308 = vunpack.c.l.b16 %v607
  %v1309 = vunpack.c.h.b16 %v607
  %v1310 = vunpack.c.l.b16 %v608
  %v1311 = vunpack.c.h.b16 %v608
  %v1312 = vunpack.c.l.b16 %v609
  %v1313 = vunpack.c.h.b16 %v609
  %v1314 = vunpack.c.l.b16 %v610
  %v1315 = vunpack.c.h.b16 %v610
  %v1316 = vunpack.c.l.b16 %v611
  %v1317 = vunpack.c.h.b16 %v611
  %v1318 = vunpack.c.l.b16 %v612
  %v1319 = vunpack.c.h.b16 %v612
  %v1320 = vunpack.c.l.b16 %v613
  %v1321 = vunpack.c.h.b16 %v613
  %v1322 = vunpack.c.l.b16 %v614
  %v1323 = vunpack.c.h.b16 %v614
  %v1324 = vunpack.c.l.b16 %v615
  %v1325 = vunpack.c.h.b16 %v615
  %v1326 = vunpack.c.l.b16 %v616
  %v1327 = vunpack.c.h.b16 %v616
  %v1328 = vunpack.c.l.b16 %v617
  %v1329 = vunpack.c.h.b16 %v617
  %v1330 = vunpack.c.l.b16 %v618
  %v1331 = vunpack.c.h.b16 %v618
  %v1332 = vunpack.c.l.b16 %v619
  %v1333 = vunpack.c.h.b16 %v619
  %v1334 = vunpack.c.l.b16 %v620
  %v1335 = vunpack.c.h.b16 %v620
  %v1336 = vunpack.c.l.b16 %v621
  %v1337 = vunpack.c.h.b16 %v621
  %v1338 = vunpack.c.l.b16 %v622
  %v1339 = vunpack.c.h.b16 %v622
  %v1340 = vunpack.c.l.b16 %v623
  %v1341 = vunpack.c.h.b16 %v623
  %v1342 = vunpack.c.l.b16 %v624
  %v1343 = vunpack.c.h.b16 %v624
  %v1344 = vunpack.c.l.b16 %v625
  %v1345 = vunpack.c.h.b16 %v625
  %v1346 = vunpack.c.l.b16 %v626
  %v1347 = vunpack.c.h.b16 %v626
  %v1348 = vunpack.c.l.b16 %v627
  %v1349 = vunpack.c.h.b16 %v627
  %v1350 = vunpack.c.l.b16 %v628
  %v1351 = vunpack.c.h.b16 %v628
  %v1352 = vunpack.c.l.b16 %v629
  %v1353 = vunpack.c.h.b16 %v629
  %v1354 = vunpack.c.l.b16 %v630
  %v1355 = vunpack.c.h.b16 %v630
  %v1356 = vunpack.c.l.b16 %v631
  %v1357 = vunpack.c.h.b16 %v631
  %v1358 = vunpack.c.l.b16 %v632
  %v1359 = vunpack.c.h.b16 %v632
  %v1360 = vunpack.c.l.b16 %v633
  %v1361 = vunpack.c.h.b16 %v633
  %v1362 = vunpack.c.l.b16 %v634
  %v1363 = vunpack.c.h.b16 %v634
  %v1364 = vunpack.c.l.b16 %v635
  %v1365 = vunpack.c.h.b16 %v635
  %v1366 = vunpack.c.l.b16 %v636
  %v1367 = vunpack.c.h.b16 %v636
  %v1368 = vunpack.c.l.b16 %v637
  %v1369 = vunpack.c.h.b16 %v637
  %v1370 = vunpack.c.l.b16 %v638
  %v1371 = vunpack.c.h.b16 %v638
  %v1372 = vunpack.c.l.b16 %v639
  %v1373 = vunpack.c.h.b16 %v639
  %v1374 = vunpack.c.l.b16 %v640
  %v1375 = vunpack.c.h.b16 %v640
  %v1376 = vunpack.c.l.b16 %v641
  %v1377 = vunpack.c.h.b16 %v641
  %v1378 = vunpack.c.l.b16 %v642
  %v1379 = vunpack.c.h.b16 %v642
  %v1380 = vunpack.c.l.b16 %v643
  %v1381 = vunpack.c.h.b16 %v643
  %v1382 = vunpack.c.l.b16 %v644
  %v1383 = vunpack.c.h.b16 %v644
  %v1384 = vunpack.c.l.b16 %v645
  %v1385 = vunpack.c.h.b16 %v645
  %v1386 = vunpack.c.l.b16 %v646
  %v1387 = vunpack.c.h.b16 %v646
  %v1388 = vunpack.c.l.b16 %v647
  %v1389 = vunpack.c.h.b16 %v647
  %v1390 = vunpack.c.l.b16 %v648
  %v1391 = vunpack.c.h.b16 %v648
  %v1392 = vunpack.c.l.b16 %v649
  %v1393 = vunpack.c.h.b16 %v649
  %v1394 = vunpack.c.l.b16 %v650
  %v1395 = vunpack.c.h.b16 %v650
  %v1396 = vunpack.c.l.b16 %v651
  %v1397 = vunpack.c.h.b16 %v651
  %v1398 = vunpack.c.l.b16 %v652
  %v1399 = vunpack.c.h.b16 %v652
  %v1400 = vunpack.c.l.b16 %v653
  %v1401 = vunpack.c.h.b16 %v653
  %v1402 = vunpack.c.l.b16 %v654
  %v1403 = vunpack.c.h.b16 %v654
  %v1404 = vunpack.c.l.b16 %v655
  %v1405 = vunpack.c.h.b16 %v655
  %v1406 = vunpack.c.l.b16 %v656
  %v1407 = vunpack.c.h.b16 %v656
  %v1408 = vunpack.c.l.b16 %v657
  %v1409 = vunpack.c.h.b16 %v657
  %v1410 = vunpack.c.l.b16 %v658
  %v1411 = vunpack.c.h.b16 %v658
  %v1412 = vunpack.c.l.b16 %v659
  %v1413 = vunpack.c.h.b16 %v659
  %v1414 = vunpack.c.l.b16 %v660
  %v1415 = vunpack.c.h.b16 %v660
  %v1416 = vunpack.c.l.b16 %v661
  %v1417 = vunpack.c.h.b16 %v661
  %v1418 = vunpack.c.l.b16 %v662
  %v1419 = vunpack.c.h.b16 %v662
  %v1420 = vunpack.c.l.b16 %v663
  %v1421 = vunpack.c.h.b16 %v663
  %v1422 = vunpack.c.l.b16 %v664
  %v1423 = vunpack.c.h.b16 %v664
  %v1424 = vunpack.c.l.b16 %v665
  %v1425 = vunpack.c.h.b16 %v665
  %v1426 = vunpack.c.l.b16 %v666
  %v1427 = vunpack.c.h.b16 %v666
  %v1428 = vunpack.c.l.b16 %v667
  %v1429 = vunpack.c.h.b16 %v667
  %v1430 = vunpack.c.l.b16 %v668
  %v1431 = vunpack.c.h.b16 %v668
  %v1432 = vunpack.c.l.b16 %v669
  %v1433 = vunpack.c.h.b16 %v669
  %v1434 = vunpack.c.l.b16 %v670
  %v1435 = vunpack.c.h.b16 %v670
  %v1436 = vunpack.c.l.b16 %v671
  %v1437 = vunpack.c.h.b16 %v671
  %v1438 = vunpack.c.l.b16 %v672
  %v1439 = vunpack.c.h.b16 %v672
  %v1440 = vunpack.c.l.b16 %v673
  %v1441 = vunpack.c.h.b16 %v673
  %v1442 = vunpack.c.l.b16 %v674
  %v1443 = vunpack.c.h.b16 %v674
  %v1444 = vunpack.c.l.b16 %v675
  %v1445 = vunpack.c.h.b16 %v675
  %v1446 = vunpack.c.l.b16 %v676
  %v1447 = vunpack.c.h.b16 %v676
  %v1448 = vunpack.c.l.b16 %v677
  %v1449 = vunpack.c.h.b16 %v677
  %v1450 = vunpack.c.l.b16 %v678
  %v1451 = vunpack.c.h.b16 %v678
  %v1452 = vunpack.c.l.b16 %v679
  %v1453 = vunpack.c.h.b16 %v679
  %v1454 = vunpack.c.l.b16 %v680
  %v1455 = vunpack.c.h.b16 %v680
  %v1456 = vunpack.c.l.b16 %v681
  %v1457 = vunpack.c.h.b16 %v681
  %v1458 = vunpack.c.l.b16 %v682
  %v1459 = vunpack.c.h.b16 %v682
  %v1460 = vunpack.c.l.b16 %v683
  %v1461 = vunpack.c.h.b16 %v683
  %v1462 = vunpack.c.l.b16 %v684
  %v1463 = vunpack.c.h.b16 %v684
  %v1464 = vunpack.c.l.b16 %v685
  %v1465 = vunpack.c.h.b16 %v685
  %v1466 = vunpack.c.l.b16 %v686
  %v1467 = vunpack.c.h.b16 %v686
  %v1468 = vunpack.c.l.b16 %v687
  %v1469 = vunpack.c.h.b16 %v687
  %v1470 = vunpack.c.l.b16 %v688
  %v1471 = vunpack.c.h.b16 %v688
  %v1472 = vunpack.c.l.b16 %v689
  %v1473 = vunpack.c.h.b16 %v689
  %v1474 = vunpack.c.l.b16 %v690
  %v1475 = vunpack.c.h.b16 %v690
  %v1476 = vunpack.c.l.b16 %v691
  %v1477 = vunpack.c.h.b16 %v691
  %v1478 = vunpack.c.l.b16 %v692
  %v1479 = vunpack.c.h.b16 %v692
  %v1480 = vunpack.c.l.b16 %v693
  %v1481 = vunpack.c.h.b16 %v693
  %v1482 = vunpack.c.l.b16 %v694
  %v1483 = vunpack.c.h.b16 %v694
  %v1484 = vunpack.c.l.b16 %v695
  %v1485 = vunpack.c.h.b16 %v695
  %v1486 = vunpack.c.l.b16 %v696
  %v1487 = vunpack.c.h.b16 %v696
  %v1488 = vunpack.c.l.b16 %v697
  %v1489 = vunpack.c.h.b16 %v697
  %v1490 = vunpack.c.l.b16 %v698
  %v1491 = vunpack.c.h.b16 %v698
  %v1492 = vunpack.c.l.b16 %v699
  %v1493 = vunpack.c.h.b16 %v699
  %v1494 = vunpack.c.l.b16 %v700
  %v1495 = vunpack.c.h.b16 %v700
  %v1496 = vunpack.c.l.b16 %v701
  %v1497 = vunpack.c.h.b16 %v701
  %v1498 = vunpack.c.l.b16 %v702
  %v1499 = vunpack.c.h.b16 %v702
  %v1500 = vunpack.c.l.b16 %v703
  %v1501 = vunpack.c.h.b16 %v703
  %v1502 = vunpack.c.l.b16 %v704
  %v1503 = vunpack.c.h.b16 %v704
  %v1504 = vunpack.c.l.b16 %v705
  %v1505 = vunpack.c.h.b16 %v705
  %v1506 = vunpack.c.l.b16 %v706
  %v1507 = vunpack.c.h.b16 %v706
  %v1508 = vunpack.c.l.b16 %v707
  %v1509 = vunpack.c.h.b16 %v707
  %v1510 = vunpack.c.l.b16 %v708
  %v1511 = vunpack.c.h.b16 %v708
  %v1512 = vunpack.c.l.b16 %v709
  %v1513 = vunpack.c.h.b16 %v709
  %v1514 = vunpack.c.l.b16 %v710
  %v1515 = vunpack.c.h.b16 %v710
  %v1516 = vunpack.c.l.b16 %v711
  %v1517 = vunpack.c.h.b16 %v711
  %v1518 = vunpack.c.l.b16 %v712
  %v1519 = vunpack.c.h.b16 %v712
  %v1520 = vunpack.c.l.b16 %v713
  %v1521 = vunpack.c.h.b16 %v713
  %v1522 = vunpack.c.l.b16 %v714
  %v1523 = vunpack.c.h.b16 %v714
  %v1524 = vunpack.c.l.b16 %v715
  %v1525 = vunpack.c.h.b16 %v715
  %v1526 = vunpack.c.l.b16 %v716
  %v1527 = vunpack.c.h.b16 %v716
  %v1528 = vunpack.c.l.b16 %v717
  %v1529 = vunpack.c.h.b16 %v717
  %v1530 = vunpack.c.l.b16 %v718
  %v1531 = vunpack.c.h.b16 %v718
  %v1532 = vunpack.c.l.b16 %v719
  %v1533 = vunpack.c.h.b16 %v719
  %v1534 = vunpack.c.l.b16 %v720
  %v1535 = vunpack.c.h.b16 %v720
  %v1536 = vunpack.c.l.b16 %v721
  %v1537 = vunpack.c.h.b16 %v721
  %v1538 = vunpack.c.l.b16 %v722
  %v1539 = vunpack.c.h.b16 %v722
  %v1540 = vunpack.c.l.b16 %v723
  %v1541 = vunpack.c.h.b16 %v723
  %v1542 = vunpack.c.l.b16 %v724
  %v1543 = vunpack.c.h.b16 %v724
  %v1544 = vunpack.c.l.b16 %v725
  %v1545 = vunpack.c.h.b16 %v725
  %v1546 = vunpack.c.l.b16 %v726
  %v1547 = vunpack.c.h.b16 %v726
  %v1548 = vunpack.c.l.b16 %v727
  %v1549 = vunpack.c.h.b16 %v727
  %v1550 = vunpack.c.l.b16 %v728
  %v1551 = vunpack.c.h.b16 %v728
  %v1552 = vunpack.c.l.b16 %v729
  %v1553 = vunpack.c.h.b16 %v729
  %v1554 = vunpack.c.l.b16 %v730
  %v1555 = vunpack.c.h.b16 %v730
  %v1556 = vunpack.c.l.b16 %v731
  %v1557 = vunpack.c.h.b16 %v731
  %v1558 = vunpack.c.l.b16 %v732
  %v1559 = vunpack.c.h.b16 %v732
  %v1560 = vunpack.c.l.b16 %v733
  %v1561 = vunpack.c.h.b16 %v733
  %v1562 = vunpack.c.l.b16 %v734
  %v1563 = vunpack.c.h.b16 %v734
  %v1564 = vunpack.c.l.b16 %v735
  %v1565 = vunpack.c.h.b16 %v735
  %v1566 = vunpack.c.l.b16 %v736
  %v1567 = vunpack.c.h.b16 %v736
  %v1568 = vunpack.c.l.b16 %v737
  %v1569 = vunpack.c.h.b16 %v737
  %v1570 = vunpack.c.l.b16 %v738
  %v1571 = vunpack.c.h.b16 %v738
  %v1572 = vunpack.c.l.b16 %v739
  %v1573 = vunpack.c.h.b16 %v739
  %v1574 = vunpack.c.l.b16 %v740
  %v1575 = vunpack.c.h.b16 %v740
  %v1576 = vunpack.c.l.b16 %v741
  %v1577 = vunpack.c.h.b16 %v741
  %v1578 = vunpack.c.l.b16 %v742
  %v1579 = vunpack.c.h.b16 %v742
  %v1580 = vunpack.c.l.b16 %v743
  %v1581 = vunpack.c.h.b16 %v743
  %v1582 = vunpack.c.l.b16 %v744
  %v1583 = vunpack.c.h.b16 %v744
  %v1584 = vunpack.c.l.b16 %v745
  %v1585 = vunpack.c.h.b16 %v745
  %v1586 = vunpack.c.l.b16 %v746
  %v1587 = vunpack.c.h.b16 %v746
  %v1588 = vunpack.c.l.b16 %v747
  %v1589 = vunpack.c.h.b16 %v747
  %v1590 = vunpack.c.l.b16 %v748
  %v1591 = vunpack.c.h.b16 %v748
  %v1592 = vunpack.c.l.b16 %v749
  %v1593 = vunpack.c.h.b16 %v749
  %v1594 = vunpack.c.l.b16 %v750
  %v1595 = vunpack.c.h.b16 %v750
  %v1596 = vunpack.c.l.b16 %v751
  %v1597 = vunpack.c.h.b16 %v751
  %v1598 = vunpack.c.l.b16 %v752
  %v1599 = vunpack.c.h.b16 %v752
  %v1600 = vunpack.c.l.b16 %v753
  %v1601 = vunpack.c.h.b16 %v753
  %v1602 = vunpack.c.l.b16 %v754
  %v1603 = vunpack.c.h.b16 %v754
  %v1604 = vunpack.c.l.b16 %v755
  %v1605 = vunpack.c.h.b16 %v755
  %v1606 = vunpack.c.l.b16 %v756
  %v1607 = vunpack.c.h.b16 %v756
  %v1608 = vunpack.c.l.b16 %v757
  %v1609 = vunpack.c.h.b16 %v757
  %v1610 = vunpack.c.l.b16 %v758
  %v1611 = vunpack.c.h.b16 %v758
  %v1612 = vunpack.c.l.b16 %v759
  %v1613 = vunpack.c.h.b16 %v759
  %v1614 = vunpack.c.l.b16 %v760
  %v1615 = vunpack.c.h.b16 %v760
  %v1616 = vunpack.c.l.b16 %v761
  %v1617 = vunpack.c.h.b16 %v761
  %v1618 = vunpack.c.l.b16 %v762
  %v1619 = vunpack.c.h.b16 %v762
  %v1620 = vunpack.c.l.b16 %v763
  %v1621 = vunpack.c.h.b16 %v763
  %v1622 = vunpack.c.l.b16 %v764
  %v1623 = vunpack.c.h.b16 %v764
  %v1624 = vunpack.c.l.b16 %v765
  %v1625 = vunpack.c.h.b16 %v765
  %v1626 = vunpack.c.l.b16 %v766
  %v1627 = vunpack.c.h.b16 %v766
  %v1628 = vunpack.c.l.b16 %v767
  %v1629 = vunpack.c.h.b16 %v767
  %v1630 = vunpack.c.l.b16 %v768
  %v1631 = vunpack.c.h.b16 %v768
  %v1632 = vunpack.c.l.b16 %v769
  %v1633 = vunpack.c.h.b16 %v769
  %v1634 = vunpack.c.l.b16 %v770
  %v1635 = vunpack.c.h.b16 %v770
  %v1636 = vunpack.c.l.b16 %v771
  %v1637 = vunpack.c.h.b16 %v771
  %v1638 = vunpack.c.l.b16 %v772
  %v1639 = vunpack.c.h.b16 %v772
  %v1640 = vunpack.c.l.b16 %v773
  %v1641 = vunpack.c.h.b16 %v773
  %v1642 = vunpack.c.l.b16 %v774
  %v1643 = vunpack.c.h.b16 %v774
  %v1644 = vunpack.c.l.b16 %v775
  %v1645 = vunpack.c.h.b16 %v775
  %v1646 = vunpack.c.l.b16 %v776
  %v1647 = vunpack.c.h.b16 %v776
  %v1648 = vunpack.c.l.b16 %v777
  %v1649 = vunpack.c.h.b16 %v777
  %v1650 = vunpack.c.l.b16 %v778
  %v1651 = vunpack.c.h.b16 %v778
  %v1652 = vunpack.c.l.b16 %v779
  %v1653 = vunpack.c.h.b16 %v779
  %v1654 = vunpack.c.l.b16 %v780
  %v1655 = vunpack.c.h.b16 %v780
  %v1656 = vunpack.c.l.b16 %v781
  %v1657 = vunpack.c.h.b16 %v781
  %v1658 = vunpack.c.l.b16 %v782
  %v1659 = vunpack.c.h.b16 %v782
  %v1660 = vunpack.c.l.b16 %v783
  %v1661 = vunpack.c.h.b16 %v783
  %v1662 = vunpack.c.l.b16 %v784
  %v1663 = vunpack.c.h.b16 %v784
  %v1664 = vunpack.c.l.b16 %v785
  %v1665 = vunpack.c.h.b16 %v785
  %v1666 = vunpack.c.l.b16 %v786
  %v1667 = vunpack.c.h.b16 %v786
  %v1668 = vunpack.c.l.b16 %v787
  %v1669 = vunpack.c.h.b16 %v787
  %v1670 = vunpack.c.l.b16 %v788
  %v1671 = vunpack.c.h.b16 %v788
  %v1672 = vunpack.c.l.b16 %v789
  %v1673 = vunpack.c.h.b16 %v789
  %v1674 = vunpack.c.l.b16 %v790
  %v1675 = vunpack.c.h.b16 %v790
  %v1676 = vunpack.c.l.b16 %v791
  %v1677 = vunpack.c.h.b16 %v791
  %v1678 = vunpack.c.l.b16 %v792
  %v1679 = vunpack.c.h.b16 %v792
  %v1680 = vunpack.c.l.b16 %v793
  %v1681 = vunpack.c.h.b16 %v793
  %v1682 = vunpack.c.l.b16 %v794
  %v1683 = vunpack.c.h.b16 %v794
  %v1684 = vunpack.c.l.b16 %v795
  %v1685 = vunpack.c.h.b16 %v795
  %v1686 = vunpack.c.l.b16 %v796
  %v1687 = vunpack.c.h.b16 %v796
  %v1688 = vunpack.c.l.b16 %v797
  %v1689 = vunpack.c.h.b16 %v797
  %v1690 = vunpack.c.l.b16 %v798
  %v1691 = vunpack.c.h.b16 %v798
  %v1692 = vunpack.c.l.b16 %v799
  %v1693 = vunpack.c.h.b16 %v799
  %v1694 = vunpack.c.l.b16 %v800
  %v1695 = vunpack.c.h.b16 %v800
  %v1696 = vunpack.c.l.b16 %v801
  %v1697 = vunpack.c.h.b16 %v801
  %v1698 = vpack.c.b16 %v1128, %v1122
  %v1699 = vpack.c.b16 %v1129, %v1123
  %v1700 = vpack.c.b16 %v1130, %v1124
  %v1701 = vpack.c.b16 %v1131, %v1125
  %v1702 = vpack.c.b16 %v1132, %v1126
  %v1703 = vpack.c.b16 %v1133, %v1127
  %v1704 = vpack.c.b16 %v1140, %v1134
  %v1705 = vpack.c.b16 %v1141, %v1135
  %v1706 = vpack.c.b16 %v1142, %v1136
  %v1707 = vpack.c.b16 %v1143, %v1137
  %v1708 = vpack.c.b16 %v1144, %v1138
  %v1709 = vpack.c.b16 %v1145, %v1139
  %v1710 = vpack.c.b16 %v1152, %v1146
  %v1711 = vpack.c.b16 %v1153, %v1147
  %v1712 = vpack.c.b16 %v1154, %v1148
  %v1713 = vpack.c.b16 %v1155, %v1149
  %v1714 = vpack.c.b16 %v1156, %v1150
  %v1715 = vpack.c.b16 %v1157, %v1151
  %v1716 = vpack.c.b16 %v1164, %v1158
  %v1717 = vpack.c.b16 %v1165, %v1159
  %v1718 = vpack.c.b16 %v1166, %v1160
  %v1719 = vpack.c.b16 %v1167, %v1161
  %v1720 = vpack.c.b16 %v1168, %v1162
  %v1721 = vpack.c.b16 %v1169, %v1163
  %v1722 = vpack.c.b16 %v1176, %v1170
  %v1723 = vpack.c.b16 %v1177, %v1171
  %v1724 = vpack.c.b16 %v1178, %v1172
  %v1725 = vpack.c.b16 %v1179, %v1173
  %v1726 = vpack.c.b16 %v1180, %v1174
  %v1727 = vpack.c.b16 %v1181, %v1175
  %v1728 = vpack.c.b16 %v1188, %v1182
  %v1729 = vpack.c.b16 %v1189, %v1183
  %v1730 = vpack.c.b16 %v1190, %v1184
  %v1731 = vpack.c.b16 %v1191, %v1185
  %v1732 = vpack.c.b16 %v1192, %v1186
  %v1733 = vpack.c.b16 %v1193, %v1187
  %v1734 = vpack.c.b16 %v1200, %v1194
  %v1735 = vpack.c.b16 %v1201, %v1195
  %v1736 = vpack.c.b16 %v1202, %v1196
  %v1737 = vpack.c.b16 %v1203, %v1197
  %v1738 = vpack.c.b16 %v1204, %v1198
  %v1739 = vpack.c.b16 %v1205, %v1199
  %v1740 = vpack.c.b16 %v1212, %v1206
  %v1741 = vpack.c.b16 %v1213, %v1207
  %v1742 = vpack.c.b16 %v1214, %v1208
  %v1743 = vpack.c.b16 %v1215, %v1209
  %v1744 = vpack.c.b16 %v1216, %v1210
  %v1745 = vpack.c.b16 %v1217, %v1211
  %v1746 = vpack.c.b16 %v1224, %v1218
  %v1747 = vpack.c.b16 %v1225, %v1219
  %v1748 = vpack.c.b16 %v1226, %v1220
  %v1749 = vpack.c.b16 %v1227, %v1221
  %v1750 = vpack.c.b16 %v1228, %v1222
  %v1751 = vpack.c.b16 %v1229, %v1223
  %v1752 = vpack.c.b16 %v1236, %v1230
  %v1753 = vpack.c.b16 %v1237, %v1231
  %v1754 = vpack.c.b16 %v1238, %v1232
  %v1755 = vpack.c.b16 %v1239, %v1233
  %v1756 = vpack.c.b16 %v1240, %v1234
  %v1757 = vpack.c.b16 %v1241, %v1235
  %v1758 = vpack.c.b16 %v1248, %v1242
  %v1759 = vpack.c.b16 %v1249, %v1243
  %v1760 = vpack.c.b16 %v1250, %v1244
  %v1761 = vpack.c.b16 %v1251, %v1245
  %v1762 = vpack.c.b16 %v1252, %v1246
  %v1763 = vpack.c.b16 %v1253, %v1247
  %v1764 = vpack.c.b16 %v1260, %v1254
  %v1765 = vpack.c.b16 %v1261, %v1255
  %v1766 = vpack.c.b16 %v1262, %v1256
  %v1767 = vpack.c.b16 %v1263, %v1257
  %v1768 = vpack.c.b16 %v1264, %v1258
  %v1769 = vpack.c.b16 %v1265, %v1259
  %v1770 = vpack.c.b16 %v1272, %v1266
  %v1771 = vpack.c.b16 %v1273, %v1267
  %v1772 = vpack.c.b16 %v1274, %v1268
  %v1773 = vpack.c.b16 %v1275, %v1269
  %v1774 = vpack.c.b16 %v1276, %v1270
  %v1775 = vpack.c.b16 %v1277, %v1271
  %v1776 = vpack.c.b16 %v1284, %v1278
  %v1777 = vpack.c.b16 %v1285, %v1279
  %v1778 = vpack.c.b16 %v1286, %v1280
  %v1779 = vpack.c.b16 %v1287, %v1281
  %v1780 = vpack.c.b16 %v1288, %v1282
  %v1781 = vpack.c.b16 %v1289, %v1283
  %v1782 = vpack.c.b16 %v1296, %v1290
  %v1783 = vpack.c.b16 %v1297, %v1291
  %v1784 = vpack.c.b16 %v1298, %v1292
  %v1785 = vpack.c.b16 %v1299, %v1293
  %v1786 = vpack.c.b16 %v1300, %v1294
  %v1787 = vpack.c.b16 %v1301, %v1295
  %v1788 = vpack.c.b16 %v1308, %v1302
  %v1789 = vpack.c.b16 %v1309, %v1303
  %v1790 = vpack.c.b16 %v1310, %v1304
  %v1791 = vpack.c.b16 %v1311, %v1305
  %v1792 = vpack.c.b16 %v1312, %v1306
  %v1793 = vpack.c.b16 %v1313, %v1307
  %v1794 = vpack.c.b16 %v1320, %v1314
  %v1795 = vpack.c.b16 %v1321, %v1315
  %v1796 = vpack.c.b16 %v1322, %v1316
  %v1797 = vpack.c.b16 %v1323, %v1317
  %v1798 = vpack.c.b16 %v1324, %v1318
  %v1799 = vpack.c.b16 %v1325, %v1319
  %v1800 = vpack.c.b16 %v1332, %v1326
  %v1801 = vpack.c.b16 %v1333, %v1327
  %v1802 = vpack.c.b16 %v1334, %v1328
  %v1803 = vpack.c.b16 %v1335, %v1329
  %v1804 = vpack.c.b16 %v1336, %v1330
  %v1805 = vpack.c.b16 %v1337, %v1331
  %v1806 = vpack.c.b16 %v1344, %v1338
  %v1807 = vpack.c.b16 %v1345, %v1339
  %v1808 = vpack.c.b16 %v1346, %v1340
  %v1809 = vpack.c.b16 %v1347, %v1341
  %v1810 = vpack.c.b16 %v1348, %v1342
  %v1811 = vpack.c.b16 %v1349, %v1343
  %v1812 = vpack.c.b16 %v1356, %v1350
  %v1813 = vpack.c.b16 %v1357, %v1351
  %v1814 = vpack.c.b16 %v1358, %v1352
  %v1815 = vpack.c.b16 %v1359, %v1353
  %v1816 = vpack.c.b16 %v1360, %v1354
  %v1817 = vpack.c.b16 %v1361, %v1355
  %v1818 = vpack.c.b16 %v1368, %v1362
  %v1819 = vpack.c.b16 %v1369, %v1363
  %v1820 = vpack.c.b16 %v1370, %v1364
  %v1821 = vpack.c.b16 %v1371, %v1365
  %v1822 = vpack.c.b16 %v1372, %v1366
  %v1823 = vpack.c.b16 %v1373, %v1367
  %v1824 = vpack.c.b16 %v1380, %v1374
  %v1825 = vpack.c.b16 %v1381, %v1375
  %v1826 = vpack.c.b16 %v1382, %v1376
  %v1827 = vpack.c.b16 %v1383, %v1377
  %v1828 = vpack.c.b16 %v1384, %v1378
  %v1829 = vpack.c.b16 %v1385, %v1379
  %v1830 = vpack.c.b16 %v1392, %v1386
  %v1831 = vpack.c.b16 %v1393, %v1387
  %v1832 = vpack.c.b16 %v1394, %v1388
  %v1833 = vpack.c.b16 %v1395, %v1389
  %v1834 = vpack.c.b16 %v1396, %v1390
  %v1835 = vpack.c.b16 %v1397, %v1391
  %v1836 = vpack.c.b16 %v1404, %v1398
  %v1837 = vpack.c.b16 %v1405, %v1399
  %v1838 = vpack.c.b16 %v1406, %v1400
  %v1839 = vpack.c.b16 %v1407, %v1401
  %v1840 = vpack.c.b16 %v1408, %v1402
  %v1841 = vpack.c.b16 %v1409, %v1403
  %v1842 = vpack.c.b16 %v1416, %v1410
  %v1843 = vpack.c.b16 %v1417, %v1411
  %v1844 = vpack.c.b16 %v1418, %v1412
  %v1845 = vpack.c.b16 %v1419, %v1413
  %v1846 = vpack.c.b16 %v1420, %v1414
  %v1847 = vpack.c.b16 %v1421, %v1415
  %v1848 = vpack.c.b16 %v1428, %v1422
  %v1849 = vpack.c.b16 %v1429, %v1423
  %v1850 = vpack.c.b16 %v1430, %v1424
  %v1851 = vpack.c.b16 %v1431, %v1425
  %v1852 = vpack.c.b16 %v1432, %v1426
  %v1853 = vpack.c.b16 %v1433, %v1427
  %v1854 = vpack.c.b16 %v1440, %v1434
  %v1855 = vpack.c.b16 %v1441, %v1435
  %v1856 = vpack.c.b16 %v1442, %v1436
  %v1857 = vpack.c.b16 %v1443, %v1437
  %v1858 = vpack.c.b16 %v1444, %v1438
  %v1859 = vpack.c.b16 %v1445, %v1439
  %v1860 = vpack.c.b16 %v1452, %v1446
  %v1861 = vpack.c.b16 %v1453, %v1447
  %v1862 = vpack.c.b16 %v1454, %v1448
  %v1863 = vpack.c.b16 %v1455, %v1449
  %v1864 = vpack.c.b16 %v1456, %v1450
  %v1865 = vpack.c.b16 %v1457, %v1451
  %v1866 = vpack.c.b16 %v1464, %v1458
  %v1867 = vpack.c.b16 %v1465, %v1459
  %v1868 = vpack.c.b16 %v1466, %v1460
  %v1869 = vpack.c.b16 %v1467, %v1461
  %v1870 = vpack.c.b16 %v1468, %v1462
  %v1871 = vpack.c.b16 %v1469, %v1463
  %v1872 = vpack.c.b16 %v1476, %v1470
  %v1873 = vpack.c.b16 %v1477, %v1471
  %v1874 = vpack.c.b16 %v1478, %v1472
  %v1875 = vpack.c.b16 %v1479, %v1473
  %v1876 = vpack.c.b16 %v1480, %v1474
  %v1877 = vpack.c.b16 %v1481, %v1475
  %v1878 = vpack.c.b16 %v1488, %v1482
  %v1879 = vpack.c.b16 %v1489, %v1483
  %v1880 = vpack.c.b16 %v1490, %v1484
  %v1881 = vpack.c.b16 %v1491, %v1485
  %v1882 = vpack.c.b16 %v1492, %v1486
  %v1883 = vpack.c.b16 %v1493, %v1487
  %v1884 = vpack.c.b16 %v1500, %v1494
  %v1885 = vpack.c.b16 %v1501, %v1495
  %v1886 = vpack.c.b16 %v1502, %v1496
  %v1887 = vpack.c.b16 %v1503, %v1497
  %v1888 = vpack.c.b16 %v1504, %v1498
  %v1889 = vpack.c.b16 %v1505, %v1499
  %v1890 = vpack.c.b16 %v1512, %v1506
  %v1891 = vpack.c.b16 %v1513, %v1507
  %v1892 = vpack.c.b16 %v1514, %v1508
  %v1893 = vpack.c.b16 %v1515, %v1509
  %v1894 = vpack.c.b16 %v1516, %v1510
  %v1895 = vpack.c.b16 %v1517, %v1511
  %v1896 = vpack.c.b16 %v1524, %v1518
  %v1897 = vpack.c.b16 %v1525, %v1519
  %v1898 = vpack.c.b16 %v1526, %v1520
  %v1899 = vpack.c.b16 %v1527, %v1521
  %v1900 = vpack.c.b16 %v1528, %v1522
  %v1901 = vpack.c.b16 %v1529, %v1523
  %v1902 = vpack.c.b16 %v1536, %v1530
  %v1903 = vpack.c.b16 %v1537, %v1531
  %v1904 = vpack.c.b16 %v1538, %v1532
  %v1905 = vpack.c.b16 %v1539, %v1533
  %v1906 = vpack.c.b16 %v1540, %v1534
  %v1907 = vpack.c.b16 %v1541, %v1535
  %v1908 = vpack.c.b16 %v1548, %v1542
  %v1909 = vpack.c.b16 %v1549, %v1543
  %v1910 = vpack.c.b16 %v1550, %v1544
  %v1911 = vpack.c.b16 %v1551, %v1545
  %v1912 = vpack.c.b16 %v1552, %v1546
  %v1913 = vpack.c.b16 %v1553, %v1547
  %v1914 = vpack.c.b16 %v1560, %v1554
  %v1915 = vpack.c.b16 %v1561, %v1555
  %v1916 = vpack.c.b16 %v1562, %v1556
  %v1917 = vpack.c.b16 %v1563, %v1557
  %v1918 = vpack.c.b16 %v1564, %v1558
  %v1919 = vpack.c.b16 %v1565, %v1559
  %v1920 = vpack.c.b16 %v1572, %v1566
  %v1921 = vpack.c.b16 %v1573, %v1567
  %v1922 = vpack.c.b16 %v1574, %v1568
  %v1923 = vpack.c.b16 %v1575, %v1569
  %v1924 = vpack.c.b16 %v1576, %v1570
  %v1925 = vpack.c.b16 %v1577, %v1571
  %v1926 = vpack.c.b16 %v1584, %v1578
  %v1927 = vpack.c.b16 %v1585, %v1579
  %v1928 = vpack.c.b16 %v1586, %v1580
  %v1929 = vpack.c.b16 %v1587, %v1581
  %v1930 = vpack.c.b16 %v1588, %v1582
  %v1931 = vpack.c.b16 %v1589, %v1583
  %v1932 = vpack.c.b16 %v1596, %v1590
  %v1933 = vpack.c.b16 %v1597, %v1591
  %v1934 = vpack.c.b16 %v1598, %v1592
  %v1935 = vpack.c.b16 %v1599, %v1593
  %v1936 = vpack.c.b16 %v1600, %v1594
  %v1937 = vpack.c.b16 %v1601, %v1595
  %v1938 = vpack.c.b16 %v1608, %v1602
  %v1939 = vpack.c.b16 %v1609, %v1603
  %v1940 = vpack.c.b16 %v1610, %v1604
  %v1941 = vpack.c.b16 %v1611, %v1605
  %v1942 = vpack.c.b16 %v1612, %v1606
  %v1943 = vpack.c.b16 %v1613, %v1607
  %v1944 = vpack.c.b16 %v1620, %v1614
  %v1945 = vpack.c.b16 %v1621, %v1615
  %v1946 = vpack.c.b16 %v1622, %v1616
  %v1947 = vpack.c.b16 %v1623, %v1617
  %v1948 = vpack.c.b16 %v1624, %v1618
  %v1949 = vpack.c.b16 %v1625, %v1619
  %v1950 = vpack.c.b16 %v1632, %v1626
  %v1951 = vpack.c.b16 %v1633, %v1627
  %v1952 = vpack.c.b16 %v1634, %v1628
  %v1953 = vpack.c.b16 %v1635, %v1629
  %v1954 = vpack.c.b16 %v1636, %v1630
  %v1955 = vpack.c.b16 %v1637, %v1631
  %v1956 = vpack.c.b16 %v1644, %v1638
  %v1957 = vpack.c.b16 %v1645, %v1639
  %v1958 = vpack.c.b16 %v1646, %v1640
  %v1959 = vpack.c.b16 %v1647, %v1641
  %v1960 = vpack.c.b16 %v1648, %v1642
  %v1961 = vpack.c.b16 %v1649, %v1643
  %v1962 = vpack.c.b16 %v1656, %v1650
  %v1963 = vpack.c.b16 %v1657, %v1651
  %v1964 = vpack.c.b16 %v1658, %v1652
  %v1965 = vpack.c.b16 %v1659, %v1653
  %v1966 = vpack.c.b16 %v1660, %v1654
  %v1967 = vpack.c.b16 %v1661, %v1655
  %v1968 = vpack.c.b16 %v1668, %v1662
  %v1969 = vpack.c.b16 %v1669, %v1663
  %v1970 = vpack.c.b16 %v1670, %v1664
  %v1971 = vpack.c.b16 %v1671, %v1665
  %v1972 = vpack.c.b16 %v1672, %v1666
  %v1973 = vpack.c.b16 %v1673, %v1667
  %v1974 = vpack.c.b16 %v1680, %v1674
  %v1975 = vpack.c.b16 %v1681, %v1675
  %v1976 = vpack.c.b16 %v1682, %v1676
  %v1977 = vpack.c.b16 %v1683, %v1677
  %v1978 = vpack.c.b16 %v1684, %v1678
  %v1979 = vpack.c.b16 %v1685, %v1679
  %v1980 = vpack.c.b16 %v1692, %v1686
  %v1981 = vpack.c.b16 %v1693, %v1687
  %v1982 = vpack.c.b16 %v1694, %v1688
  %v1983 = vpack.c.b16 %v1695, %v1689
  %v1984 = vpack.c.b16 %v1696, %v1690
  %v1985 = vpack.c.b16 %v1697, %v1691
  %2274 = vmatprep.subr.bf16.mxu0 %v1699
  %2275 = vmatpush1.bf16.msra.mxu0 %v1698
  %2276 = vmatprep.subr.bf16.mxu0 %v1705
  %2277 = vmatpush1.bf16.msra.mxu0 %v1704
  %2278 = vmatprep.subr.bf16.mxu0 %v1711
  %2279 = vmatpush1.bf16.msra.mxu0 %v1710
  %2280 = vmatprep.subr.bf16.mxu0 %v1717
  %2281 = vmatpush1.bf16.msra.mxu0 %v1716
  %2282 = vmatprep.subr.bf16.mxu0 %v1723
  %2283 = vmatpush1.bf16.msra.mxu0 %v1722
  %2284 = vmatprep.subr.bf16.mxu0 %v1729
  %2285 = vmatpush1.bf16.msra.mxu0 %v1728
  %2286 = vmatprep.subr.bf16.mxu0 %v1735
  %2287 = vmatpush1.bf16.msra.mxu0 %v1734
  %2288 = vmatprep.subr.bf16.mxu0 %v1741
  %2289 = vmatpush1.bf16.msra.mxu0 %v1740
  %2290 = vmatprep.subr.bf16.mxu0 %v1747
  %2291 = vmatpush1.bf16.msra.mxu0 %v1746
  %2292 = vmatprep.subr.bf16.mxu0 %v1753
  %2293 = vmatpush1.bf16.msra.mxu0 %v1752
  %2294 = vmatprep.subr.bf16.mxu0 %v1759
  %2295 = vmatpush1.bf16.msra.mxu0 %v1758
  %2296 = vmatprep.subr.bf16.mxu0 %v1765
  %2297 = vmatpush1.bf16.msra.mxu0 %v1764
  %2298 = vmatprep.subr.bf16.mxu0 %v1771
  %2299 = vmatpush1.bf16.msra.mxu0 %v1770
  %2300 = vmatprep.subr.bf16.mxu0 %v1777
  %2301 = vmatpush1.bf16.msra.mxu0 %v1776
  %2302 = vmatprep.subr.bf16.mxu0 %v1783
  %2303 = vmatpush1.bf16.msra.mxu0 %v1782
  %2304 = vmatprep.subr.bf16.mxu0 %v1789
  %2305 = vmatpush1.bf16.msra.mxu0 %v1788
  %2306 = vmatprep.mubr.bf16.mxu0 %v509
  %2307 = vmatmul.mubr.bf16.gmra.mrb[0].mxu0 %v508
  %v2308 = vpop.f32.mrb[0].mxu0
  %v2309 = vadd.f32 %v807, %v2308
  %v2310 = vpop.f32.mrb[0].mxu0
  %v2311 = vadd.f32 %v811, %v2310
  %v2312 = vpop.f32.mrb[0].mxu0
  %v2313 = vadd.f32 %v807, %v2312
  %v2314 = vpop.f32.mrb[0].mxu0
  %v2315 = vadd.f32 %v811, %v2314
  %2316 = vdwg.mxu0
  %2317 = vmatprep.subr.bf16.mxu0 %v1795
  %2318 = vmatpush1.bf16.msra.mxu0 %v1794
  %2319 = vmatprep.subr.bf16.mxu0 %v1801
  %2320 = vmatpush1.bf16.msra.mxu0 %v1800
  %2321 = vmatprep.subr.bf16.mxu0 %v1807
  %2322 = vmatpush1.bf16.msra.mxu0 %v1806
  %2323 = vmatprep.subr.bf16.mxu0 %v1813
  %2324 = vmatpush1.bf16.msra.mxu0 %v1812
  %2325 = vmatprep.subr.bf16.mxu0 %v1819
  %2326 = vmatpush1.bf16.msra.mxu0 %v1818
  %2327 = vmatprep.subr.bf16.mxu0 %v1825
  %2328 = vmatpush1.bf16.msra.mxu0 %v1824
  %2329 = vmatprep.subr.bf16.mxu0 %v1831
  %2330 = vmatpush1.bf16.msra.mxu0 %v1830
  %2331 = vmatprep.subr.bf16.mxu0 %v1837
  %2332 = vmatpush1.bf16.msra.mxu0 %v1836
  %2333 = vmatprep.subr.bf16.mxu0 %v1843
  %2334 = vmatpush1.bf16.msra.mxu0 %v1842
  %2335 = vmatprep.subr.bf16.mxu0 %v1849
  %2336 = vmatpush1.bf16.msra.mxu0 %v1848
  %2337 = vmatprep.subr.bf16.mxu0 %v1855
  %2338 = vmatpush1.bf16.msra.mxu0 %v1854
  %2339 = vmatprep.subr.bf16.mxu0 %v1861
  %2340 = vmatpush1.bf16.msra.mxu0 %v1860
  %2341 = vmatprep.subr.bf16.mxu0 %v1867
  %2342 = vmatpush1.bf16.msra.mxu0 %v1866
  %2343 = vmatprep.subr.bf16.mxu0 %v1873
  %2344 = vmatpush1.bf16.msra.mxu0 %v1872
  %2345 = vmatprep.subr.bf16.mxu0 %v1879
  %2346 = vmatpush1.bf16.msra.mxu0 %v1878
  %2347 = vmatprep.subr.bf16.mxu0 %v1885
  %2348 = vmatpush1.bf16.msra.mxu0 %v1884
  %2349 = vmatprep.mubr.bf16.mxu0 %v511
  %2350 = vmatmul.mubr.bf16.gmra.mrb[0].mxu0 %v510
  %v2351 = vpop.f32.mrb[0].mxu0
  %v2352 = vadd.f32 %v2309, %v2351
  %v2353 = vpop.f32.mrb[0].mxu0
  %v2354 = vadd.f32 %v2311, %v2353
  %v2355 = vpop.f32.mrb[0].mxu0
  %v2356 = vadd.f32 %v2313, %v2355
  %v2357 = vpop.f32.mrb[0].mxu0
  %v2358 = vadd.f32 %v2315, %v2357
  %2359 = vdwg.mxu0
  %2360 = vmatprep.subr.bf16.mxu0 %v1891
  %2361 = vmatpush1.bf16.msra.mxu0 %v1890
  %2362 = vmatprep.subr.bf16.mxu0 %v1897
  %2363 = vmatpush1.bf16.msra.mxu0 %v1896
  %2364 = vmatprep.subr.bf16.mxu0 %v1903
  %2365 = vmatpush1.bf16.msra.mxu0 %v1902
  %2366 = vmatprep.subr.bf16.mxu0 %v1909
  %2367 = vmatpush1.bf16.msra.mxu0 %v1908
  %2368 = vmatprep.subr.bf16.mxu0 %v1915
  %2369 = vmatpush1.bf16.msra.mxu0 %v1914
  %2370 = vmatprep.subr.bf16.mxu0 %v1921
  %2371 = vmatpush1.bf16.msra.mxu0 %v1920
  %2372 = vmatprep.subr.bf16.mxu0 %v1927
  %2373 = vmatpush1.bf16.msra.mxu0 %v1926
  %2374 = vmatprep.subr.bf16.mxu0 %v1933
  %2375 = vmatpush1.bf16.msra.mxu0 %v1932
  %2376 = vmatprep.subr.bf16.mxu0 %v1939
  %2377 = vmatpush1.bf16.msra.mxu0 %v1938
  %2378 = vmatprep.subr.bf16.mxu0 %v1945
  %2379 = vmatpush1.bf16.msra.mxu0 %v1944
  %2380 = vmatprep.subr.bf16.mxu0 %v1951
  %2381 = vmatpush1.bf16.msra.mxu0 %v1950
  %2382 = vmatprep.subr.bf16.mxu0 %v1957
  %2383 = vmatpush1.bf16.msra.mxu0 %v1956
  %2384 = vmatprep.subr.bf16.mxu0 %v1963
  %2385 = vmatpush1.bf16.msra.mxu0 %v1962
  %2386 = vmatprep.subr.bf16.mxu0 %v1969
  %2387 = vmatpush1.bf16.msra.mxu0 %v1968
  %2388 = vmatprep.subr.bf16.mxu0 %v1975
  %2389 = vmatpush1.bf16.msra.mxu0 %v1974
  %2390 = vmatprep.subr.bf16.mxu0 %v1981
  %2391 = vmatpush1.bf16.msra.mxu0 %v1980
  %2392 = vmatprep.mubr.bf16.mxu0 %v513
  %2393 = vmatmul.mubr.bf16.gmra.mrb[0].mxu0 %v512
  %v2394 = vpop.f32.mrb[0].mxu0
  %v2395 = vadd.f32 %v2352, %v2394
  %v2396 = vpop.f32.mrb[0].mxu0
  %v2397 = vadd.f32 %v2354, %v2396
  %v2398 = vpop.f32.mrb[0].mxu0
  %v2399 = vadd.f32 %v2356, %v2398
  %v2400 = vpop.f32.mrb[0].mxu0
  %v2401 = vadd.f32 %v2358, %v2400
  %2402 = vdwg.mxu0
  %2403 = vmatprep.subr.bf16.mxu0 %v1701
  %2404 = vmatpush1.bf16.msra.mxu0 %v1700
  %2405 = vmatprep.subr.bf16.mxu0 %v1707
  %2406 = vmatpush1.bf16.msra.mxu0 %v1706
  %2407 = vmatprep.subr.bf16.mxu0 %v1713
  %2408 = vmatpush1.bf16.msra.mxu0 %v1712
  %2409 = vmatprep.subr.bf16.mxu0 %v1719
  %2410 = vmatpush1.bf16.msra.mxu0 %v1718
  %2411 = vmatprep.subr.bf16.mxu0 %v1725
  %2412 = vmatpush1.bf16.msra.mxu0 %v1724
  %2413 = vmatprep.subr.bf16.mxu0 %v1731
  %2414 = vmatpush1.bf16.msra.mxu0 %v1730
  %2415 = vmatprep.subr.bf16.mxu0 %v1737
  %2416 = vmatpush1.bf16.msra.mxu0 %v1736
  %2417 = vmatprep.subr.bf16.mxu0 %v1743
  %2418 = vmatpush1.bf16.msra.mxu0 %v1742
  %2419 = vmatprep.subr.bf16.mxu0 %v1749
  %2420 = vmatpush1.bf16.msra.mxu0 %v1748
  %2421 = vmatprep.subr.bf16.mxu0 %v1755
  %2422 = vmatpush1.bf16.msra.mxu0 %v1754
  %2423 = vmatprep.subr.bf16.mxu0 %v1761
  %2424 = vmatpush1.bf16.msra.mxu0 %v1760
  %2425 = vmatprep.subr.bf16.mxu0 %v1767
  %2426 = vmatpush1.bf16.msra.mxu0 %v1766
  %2427 = vmatprep.subr.bf16.mxu0 %v1773
  %2428 = vmatpush1.bf16.msra.mxu0 %v1772
  %2429 = vmatprep.subr.bf16.mxu0 %v1779
  %2430 = vmatpush1.bf16.msra.mxu0 %v1778
  %2431 = vmatprep.subr.bf16.mxu0 %v1785
  %2432 = vmatpush1.bf16.msra.mxu0 %v1784
  %2433 = vmatprep.subr.bf16.mxu0 %v1791
  %2434 = vmatpush1.bf16.msra.mxu0 %v1790
  %2435 = vmatprep.mubr.bf16.mxu0 %v509
  %2436 = vmatmul.mubr.bf16.gmra.mrb[0].mxu0 %v508
  %v2437 = vpop.f32.mrb[0].mxu0
  %v2438 = vadd.f32 %v815, %v2437
  %v2439 = vpop.f32.mrb[0].mxu0
  %v2440 = vadd.f32 %v819, %v2439
  %v2441 = vpop.f32.mrb[0].mxu0
  %v2442 = vadd.f32 %v815, %v2441
  %v2443 = vpop.f32.mrb[0].mxu0
  %v2444 = vadd.f32 %v819, %v2443
  %2445 = vdwg.mxu0
  %2446 = vmatprep.subr.bf16.mxu0 %v1797
  %2447 = vmatpush1.bf16.msra.mxu0 %v1796
  %2448 = vmatprep.subr.bf16.mxu0 %v1803
  %2449 = vmatpush1.bf16.msra.mxu0 %v1802
  %2450 = vmatprep.subr.bf16.mxu0 %v1809
  %2451 = vmatpush1.bf16.msra.mxu0 %v1808
  %2452 = vmatprep.subr.bf16.mxu0 %v1815
  %2453 = vmatpush1.bf16.msra.mxu0 %v1814
  %2454 = vmatprep.subr.bf16.mxu0 %v1821
  %2455 = vmatpush1.bf16.msra.mxu0 %v1820
  %2456 = vmatprep.subr.bf16.mxu0 %v1827
  %2457 = vmatpush1.bf16.msra.mxu0 %v1826
  %2458 = vmatprep.subr.bf16.mxu0 %v1833
  %2459 = vmatpush1.bf16.msra.mxu0 %v1832
  %2460 = vmatprep.subr.bf16.mxu0 %v1839
  %2461 = vmatpush1.bf16.msra.mxu0 %v1838
  %2462 = vmatprep.subr.bf16.mxu0 %v1845
  %2463 = vmatpush1.bf16.msra.mxu0 %v1844
  %2464 = vmatprep.subr.bf16.mxu0 %v1851
  %2465 = vmatpush1.bf16.msra.mxu0 %v1850
  %2466 = vmatprep.subr.bf16.mxu0 %v1857
  %2467 = vmatpush1.bf16.msra.mxu0 %v1856
  %2468 = vmatprep.subr.bf16.mxu0 %v1863
  %2469 = vmatpush1.bf16.msra.mxu0 %v1862
  %2470 = vmatprep.subr.bf16.mxu0 %v1869
  %2471 = vmatpush1.bf16.msra.mxu0 %v1868
  %2472 = vmatprep.subr.bf16.mxu0 %v1875
  %2473 = vmatpush1.bf16.msra.mxu0 %v1874
  %2474 = vmatprep.subr.bf16.mxu0 %v1881
  %2475 = vmatpush1.bf16.msra.mxu0 %v1880
  %2476 = vmatprep.subr.bf16.mxu0 %v1887
  %2477 = vmatpush1.bf16.msra.mxu0 %v1886
  %2478 = vmatprep.mubr.bf16.mxu0 %v511
  %2479 = vmatmul.mubr.bf16.gmra.mrb[0].mxu0 %v510
  %v2480 = vpop.f32.mrb[0].mxu0
  %v2481 = vadd.f32 %v2438, %v2480
  %v2482 = vpop.f32.mrb[0].mxu0
  %v2483 = vadd.f32 %v2440, %v2482
  %v2484 = vpop.f32.mrb[0].mxu0
  %v2485 = vadd.f32 %v2442, %v2484
  %v2486 = vpop.f32.mrb[0].mxu0
  %v2487 = vadd.f32 %v2444, %v2486
  %2488 = vdwg.mxu0
  %2489 = vmatprep.subr.bf16.mxu0 %v1893
  %2490 = vmatpush1.bf16.msra.mxu0 %v1892
  %2491 = vmatprep.subr.bf16.mxu0 %v1899
  %2492 = vmatpush1.bf16.msra.mxu0 %v1898
  %2493 = vmatprep.subr.bf16.mxu0 %v1905
  %2494 = vmatpush1.bf16.msra.mxu0 %v1904
  %2495 = vmatprep.subr.bf16.mxu0 %v1911
  %2496 = vmatpush1.bf16.msra.mxu0 %v1910
  %2497 = vmatprep.subr.bf16.mxu0 %v1917
  %2498 = vmatpush1.bf16.msra.mxu0 %v1916
  %2499 = vmatprep.subr.bf16.mxu0 %v1923
  %2500 = vmatpush1.bf16.msra.mxu0 %v1922
  %2501 = vmatprep.subr.bf16.mxu0 %v1929
  %2502 = vmatpush1.bf16.msra.mxu0 %v1928
  %2503 = vmatprep.subr.bf16.mxu0 %v1935
  %2504 = vmatpush1.bf16.msra.mxu0 %v1934
  %2505 = vmatprep.subr.bf16.mxu0 %v1941
  %2506 = vmatpush1.bf16.msra.mxu0 %v1940
  %2507 = vmatprep.subr.bf16.mxu0 %v1947
  %2508 = vmatpush1.bf16.msra.mxu0 %v1946
  %2509 = vmatprep.subr.bf16.mxu0 %v1953
  %2510 = vmatpush1.bf16.msra.mxu0 %v1952
  %2511 = vmatprep.subr.bf16.mxu0 %v1959
  %2512 = vmatpush1.bf16.msra.mxu0 %v1958
  %2513 = vmatprep.subr.bf16.mxu0 %v1965
  %2514 = vmatpush1.bf16.msra.mxu0 %v1964
  %2515 = vmatprep.subr.bf16.mxu0 %v1971
  %2516 = vmatpush1.bf16.msra.mxu0 %v1970
  %2517 = vmatprep.subr.bf16.mxu0 %v1977
  %2518 = vmatpush1.bf16.msra.mxu0 %v1976
  %2519 = vmatprep.subr.bf16.mxu0 %v1983
  %2520 = vmatpush1.bf16.msra.mxu0 %v1982
  %2521 = vmatprep.mubr.bf16.mxu0 %v513
  %2522 = vmatmul.mubr.bf16.gmra.mrb[0].mxu0 %v512
  %v2523 = vpop.f32.mrb[0].mxu0
  %v2524 = vadd.f32 %v2481, %v2523
  %v2525 = vpop.f32.mrb[0].mxu0
  %v2526 = vadd.f32 %v2483, %v2525
  %v2527 = vpop.f32.mrb[0].mxu0
  %v2528 = vadd.f32 %v2485, %v2527
  %v2529 = vpop.f32.mrb[0].mxu0
  %v2530 = vadd.f32 %v2487, %v2529
  %2531 = vdwg.mxu0
  %2532 = vmatprep.subr.bf16.mxu0 %v1703
  %2533 = vmatpush1.bf16.msra.mxu0 %v1702
  %2534 = vmatprep.subr.bf16.mxu0 %v1709
  %2535 = vmatpush1.bf16.msra.mxu0 %v1708
  %2536 = vmatprep.subr.bf16.mxu0 %v1715
  %2537 = vmatpush1.bf16.msra.mxu0 %v1714
  %2538 = vmatprep.subr.bf16.mxu0 %v1721
  %2539 = vmatpush1.bf16.msra.mxu0 %v1720
  %2540 = vmatprep.subr.bf16.mxu0 %v1727
  %2541 = vmatpush1.bf16.msra.mxu0 %v1726
  %2542 = vmatprep.subr.bf16.mxu0 %v1733
  %2543 = vmatpush1.bf16.msra.mxu0 %v1732
  %2544 = vmatprep.subr.bf16.mxu0 %v1739
  %2545 = vmatpush1.bf16.msra.mxu0 %v1738
  %2546 = vmatprep.subr.bf16.mxu0 %v1745
  %2547 = vmatpush1.bf16.msra.mxu0 %v1744
  %2548 = vmatprep.subr.bf16.mxu0 %v1751
  %2549 = vmatpush1.bf16.msra.mxu0 %v1750
  %2550 = vmatprep.subr.bf16.mxu0 %v1757
  %2551 = vmatpush1.bf16.msra.mxu0 %v1756
  %2552 = vmatprep.subr.bf16.mxu0 %v1763
  %2553 = vmatpush1.bf16.msra.mxu0 %v1762
  %2554 = vmatprep.subr.bf16.mxu0 %v1769
  %2555 = vmatpush1.bf16.msra.mxu0 %v1768
  %2556 = vmatprep.subr.bf16.mxu0 %v1775
  %2557 = vmatpush1.bf16.msra.mxu0 %v1774
  %2558 = vmatprep.subr.bf16.mxu0 %v1781
  %2559 = vmatpush1.bf16.msra.mxu0 %v1780
  %2560 = vmatprep.subr.bf16.mxu0 %v1787
  %2561 = vmatpush1.bf16.msra.mxu0 %v1786
  %2562 = vmatprep.subr.bf16.mxu0 %v1793
  %2563 = vmatpush1.bf16.msra.mxu0 %v1792
  %2564 = vmatprep.mubr.bf16.mxu0 %v509
  %2565 = vmatmul.mubr.bf16.gmra.mrb[0].mxu0 %v508
  %v2566 = vpop.f32.mrb[0].mxu0
  %v2567 = vadd.f32 %v823, %v2566
  %v2568 = vpop.f32.mrb[0].mxu0
  %v2569 = vadd.f32 %v827, %v2568
  %v2570 = vpop.f32.mrb[0].mxu0
  %v2571 = vadd.f32 %v823, %v2570
  %v2572 = vpop.f32.mrb[0].mxu0
  %v2573 = vadd.f32 %v827, %v2572
  %2574 = vdwg.mxu0
  %2575 = vmatprep.subr.bf16.mxu0 %v1799
  %2576 = vmatpush1.bf16.msra.mxu0 %v1798
  %2577 = vmatprep.subr.bf16.mxu0 %v1805
  %2578 = vmatpush1.bf16.msra.mxu0 %v1804
  %2579 = vmatprep.subr.bf16.mxu0 %v1811
  %2580 = vmatpush1.bf16.msra.mxu0 %v1810
  %2581 = vmatprep.subr.bf16.mxu0 %v1817
  %2582 = vmatpush1.bf16.msra.mxu0 %v1816
  %2583 = vmatprep.subr.bf16.mxu0 %v1823
  %2584 = vmatpush1.bf16.msra.mxu0 %v1822
  %2585 = vmatprep.subr.bf16.mxu0 %v1829
  %2586 = vmatpush1.bf16.msra.mxu0 %v1828
  %2587 = vmatprep.subr.bf16.mxu0 %v1835
  %2588 = vmatpush1.bf16.msra.mxu0 %v1834
  %2589 = vmatprep.subr.bf16.mxu0 %v1841
  %2590 = vmatpush1.bf16.msra.mxu0 %v1840
  %2591 = vmatprep.subr.bf16.mxu0 %v1847
  %2592 = vmatpush1.bf16.msra.mxu0 %v1846
  %2593 = vmatprep.subr.bf16.mxu0 %v1853
  %2594 = vmatpush1.bf16.msra.mxu0 %v1852
  %2595 = vmatprep.subr.bf16.mxu0 %v1859
  %2596 = vmatpush1.bf16.msra.mxu0 %v1858
  %2597 = vmatprep.subr.bf16.mxu0 %v1865
  %2598 = vmatpush1.bf16.msra.mxu0 %v1864
  %2599 = vmatprep.subr.bf16.mxu0 %v1871
  %2600 = vmatpush1.bf16.msra.mxu0 %v1870
  %2601 = vmatprep.subr.bf16.mxu0 %v1877
  %2602 = vmatpush1.bf16.msra.mxu0 %v1876
  %2603 = vmatprep.subr.bf16.mxu0 %v1883
  %2604 = vmatpush1.bf16.msra.mxu0 %v1882
  %2605 = vmatprep.subr.bf16.mxu0 %v1889
  %2606 = vmatpush1.bf16.msra.mxu0 %v1888
  %2607 = vmatprep.mubr.bf16.mxu0 %v511
  %2608 = vmatmul.mubr.bf16.gmra.mrb[0].mxu0 %v510
  %v2609 = vpop.f32.mrb[0].mxu0
  %v2610 = vadd.f32 %v2567, %v2609
  %v2611 = vpop.f32.mrb[0].mxu0
  %v2612 = vadd.f32 %v2569, %v2611
  %v2613 = vpop.f32.mrb[0].mxu0
  %v2614 = vadd.f32 %v2571, %v2613
  %v2615 = vpop.f32.mrb[0].mxu0
  %v2616 = vadd.f32 %v2573, %v2615
  %2617 = vdwg.mxu0
  %2618 = vmatprep.subr.bf16.mxu0 %v1895
  %2619 = vmatpush1.bf16.msra.mxu0 %v1894
  %2620 = vmatprep.subr.bf16.mxu0 %v1901
  %2621 = vmatpush1.bf16.msra.mxu0 %v1900
  %2622 = vmatprep.subr.bf16.mxu0 %v1907
  %2623 = vmatpush1.bf16.msra.mxu0 %v1906
  %2624 = vmatprep.subr.bf16.mxu0 %v1913
  %2625 = vmatpush1.bf16.msra.mxu0 %v1912
  %2626 = vmatprep.subr.bf16.mxu0 %v1919
  %2627 = vmatpush1.bf16.msra.mxu0 %v1918
  %2628 = vmatprep.subr.bf16.mxu0 %v1925
  %2629 = vmatpush1.bf16.msra.mxu0 %v1924
  %2630 = vmatprep.subr.bf16.mxu0 %v1931
  %2631 = vmatpush1.bf16.msra.mxu0 %v1930
  %2632 = vmatprep.subr.bf16.mxu0 %v1937
  %2633 = vmatpush1.bf16.msra.mxu0 %v1936
  %2634 = vmatprep.subr.bf16.mxu0 %v1943
  %2635 = vmatpush1.bf16.msra.mxu0 %v1942
  %2636 = vmatprep.subr.bf16.mxu0 %v1949
  %2637 = vmatpush1.bf16.msra.mxu0 %v1948
  %2638 = vmatprep.subr.bf16.mxu0 %v1955
  %2639 = vmatpush1.bf16.msra.mxu0 %v1954
  %2640 = vmatprep.subr.bf16.mxu0 %v1961
  %2641 = vmatpush1.bf16.msra.mxu0 %v1960
  %2642 = vmatprep.subr.bf16.mxu0 %v1967
  %2643 = vmatpush1.bf16.msra.mxu0 %v1966
  %2644 = vmatprep.subr.bf16.mxu0 %v1973
  %2645 = vmatpush1.bf16.msra.mxu0 %v1972
  %2646 = vmatprep.subr.bf16.mxu0 %v1979
  %2647 = vmatpush1.bf16.msra.mxu0 %v1978
  %2648 = vmatprep.subr.bf16.mxu0 %v1985
  %2649 = vmatpush1.bf16.msra.mxu0 %v1984
  %2650 = vmatprep.mubr.bf16.mxu0 %v513
  %2651 = vmatmul.mubr.bf16.gmra.mrb[0].mxu0 %v512
  %v2652 = vpop.f32.mrb[0].mxu0
  %v2653 = vadd.f32 %v2610, %v2652
  %v2654 = vpop.f32.mrb[0].mxu0
  %v2655 = vadd.f32 %v2612, %v2654
  %v2656 = vpop.f32.mrb[0].mxu0
  %v2657 = vadd.f32 %v2614, %v2656
  %v2658 = vpop.f32.mrb[0].mxu0
  %v2659 = vadd.f32 %v2616, %v2658
  %2660 = vdwg.mxu0
  %v2661 = vmax.f32 %v2395, 0.0
  %v2662 = vmax.f32 %v2397, 0.0
  %v2663 = vmax.f32 %v2524, 0.0
  %v2664 = vmax.f32 %v2526, 0.0
  %v2665 = vmax.f32 %v2653, 0.0
  %v2666 = vmax.f32 %v2655, 0.0
  %v2667 = vmax.f32 %v2399, 0.0
  %v2668 = vmax.f32 %v2401, 0.0
  %v2669 = vmax.f32 %v2528, 0.0
  %v2670 = vmax.f32 %v2530, 0.0
  %v2671 = vmax.f32 %v2657, 0.0
  %v2672 = vmax.f32 %v2659, 0.0
  %v2673 = vpack.c.bf16 %v2667, %v2661
  %v2674 = vpack.c.bf16 %v2668, %v2662
  %v2675 = vpack.c.bf16 %v2669, %v2663
  %v2676 = vpack.c.bf16 %v2670, %v2664
  %v2677 = vpack.c.bf16 %v2671, %v2665
  %v2678 = vpack.c.bf16 %v2672, %v2666
  %2679 = vst [vmem:[#allocation3] sm:$0xff] %v2673
  %2680 = vst [vmem:[#allocation3 + $0x8] sm:$0xff] %v2674
  %2681 = vst [vmem:[#allocation3 + $0x10] sm:$0xff] %v2675
  %2682 = vst [vmem:[#allocation3 + $0x18] sm:$0xff] %v2676
  %2683 = vst [vmem:[#allocation3 + $0x20] sm:$0xff] %v2677
  %2684 = vst [vmem:[#allocation3 + $0x28] sm:$0xff] %v2678
  %v2685 = vld [vmem:[#allocation3] sm:$0xff]
  %v2686 = vld [vmem:[#allocation3 + $0x8] sm:$0xff]
  %v2687 = vld [vmem:[#allocation3 + $0x10] sm:$0xff]
  %v2688 = vld [vmem:[#allocation3 + $0x18] sm:$0xff]
  %v2689 = vld [vmem:[#allocation3 + $0x20] sm:$0xff]
  %v2690 = vld [vmem:[#allocation3 + $0x28] sm:$0xff]
  %v2691 = vld [vmem:[%s5] sm:$0xf]
  %v2692 = vld [vmem:[%s5 + $0x4] sm:$0xf]
  %v2693 = vld [vmem:[%s5 + $0x8] sm:$0xf]
  %v2694 = vld [vmem:[%s5 + $0xc] sm:$0xf]
  %v2695 = vld [vmem:[%s5 + $0x10] sm:$0xf]
  %v2696 = vld [vmem:[%s5 + $0x14] sm:$0xf]
  %v2697 = vld [vmem:[%s5 + $0x18] sm:$0xf]
  %v2698 = vld [vmem:[%s5 + $0x1c] sm:$0xf]
  %v2699 = vld [vmem:[%s5 + $0x20] sm:$0xf]
  %v2700 = vld [vmem:[%s5 + $0x24] sm:$0xf]
  %v2701 = vld [vmem:[%s5 + $0x28] sm:$0xf]
  %v2702 = vld [vmem:[%s5 + $0x2c] sm:$0xf]
  %v2703 = vld [vmem:[%s5 + $0x30] sm:$0xf]
  %v2704 = vld [vmem:[%s5 + $0x34] sm:$0xf]
  %v2705 = vld [vmem:[%s5 + $0x38] sm:$0xf]
  %v2706 = vld [vmem:[%s5 + $0x3c] sm:$0xf]
  %v2707 = vld [vmem:[%s5 + $0x40] sm:$0xf]
  %v2708 = vld [vmem:[%s5 + $0x44] sm:$0xf]
  %v2709 = vld [vmem:[%s5 + $0x48] sm:$0xf]
  %v2710 = vld [vmem:[%s5 + $0x4c] sm:$0xf]
  %v2711 = vld [vmem:[%s5 + $0x50] sm:$0xf]
  %v2712 = vld [vmem:[%s5 + $0x54] sm:$0xf]
  %v2713 = vld [vmem:[%s5 + $0x58] sm:$0xf]
  %v2714 = vld [vmem:[%s5 + $0x5c] sm:$0xf]
  %v2715 = vld [vmem:[%s5 + $0x60] sm:$0xf]
  %v2716 = vld [vmem:[%s5 + $0x64] sm:$0xf]
  %v2717 = vld [vmem:[%s5 + $0x68] sm:$0xf]
  %v2718 = vld [vmem:[%s5 + $0x6c] sm:$0xf]
  %v2719 = vld [vmem:[%s5 + $0x70] sm:$0xf]
  %v2720 = vld [vmem:[%s5 + $0x74] sm:$0xf]
  %v2721 = vld [vmem:[%s5 + $0x78] sm:$0xf]
  %v2722 = vld [vmem:[%s5 + $0x7c] sm:$0xf]
  %v2723 = vld [vmem:[%s5 + $0x80] sm:$0xf]
  %v2724 = vld [vmem:[%s5 + $0x84] sm:$0xf]
  %v2725 = vld [vmem:[%s5 + $0x88] sm:$0xf]
  %v2726 = vld [vmem:[%s5 + $0x8c] sm:$0xf]
  %v2727 = vld [vmem:[%s5 + $0x90] sm:$0xf]
  %v2728 = vld [vmem:[%s5 + $0x94] sm:$0xf]
  %v2729 = vld [vmem:[%s5 + $0x98] sm:$0xf]
  %v2730 = vld [vmem:[%s5 + $0x9c] sm:$0xf]
  %v2731 = vld [vmem:[%s5 + $0xa0] sm:$0xf]
  %v2732 = vld [vmem:[%s5 + $0xa4] sm:$0xf]
  %v2733 = vld [vmem:[%s5 + $0xa8] sm:$0xf]
  %v2734 = vld [vmem:[%s5 + $0xac] sm:$0xf]
  %v2735 = vld [vmem:[%s5 + $0xb0] sm:$0xf]
  %v2736 = vld [vmem:[%s5 + $0xb4] sm:$0xf]
  %v2737 = vld [vmem:[%s5 + $0xb8] sm:$0xf]
  %v2738 = vld [vmem:[%s5 + $0xbc] sm:$0xf]
  %v2739 = vld [vmem:[%s5 + $0xc0] sm:$0xf]
  %v2740 = vld [vmem:[%s5 + $0xc4] sm:$0xf]
  %v2741 = vld [vmem:[%s5 + $0xc8] sm:$0xf]
  %v2742 = vld [vmem:[%s5 + $0xcc] sm:$0xf]
  %v2743 = vld [vmem:[%s5 + $0xd0] sm:$0xf]
  %v2744 = vld [vmem:[%s5 + $0xd4] sm:$0xf]
  %v2745 = vld [vmem:[%s5 + $0xd8] sm:$0xf]
  %v2746 = vld [vmem:[%s5 + $0xdc] sm:$0xf]
  %v2747 = vld [vmem:[%s5 + $0xe0] sm:$0xf]
  %v2748 = vld [vmem:[%s5 + $0xe4] sm:$0xf]
  %v2749 = vld [vmem:[%s5 + $0xe8] sm:$0xf]
  %v2750 = vld [vmem:[%s5 + $0xec] sm:$0xf]
  %v2751 = vld [vmem:[%s5 + $0xf0] sm:$0xf]
  %v2752 = vld [vmem:[%s5 + $0xf4] sm:$0xf]
  %v2753 = vld [vmem:[%s5 + $0xf8] sm:$0xf]
  %v2754 = vld [vmem:[%s5 + $0xfc] sm:$0xf]
  %v2755 = vld [vmem:[%s5 + $0x100] sm:$0xf]
  %v2756 = vld [vmem:[%s5 + $0x104] sm:$0xf]
  %v2757 = vld [vmem:[%s5 + $0x108] sm:$0xf]
  %v2758 = vld [vmem:[%s5 + $0x10c] sm:$0xf]
  %v2759 = vld [vmem:[%s5 + $0x110] sm:$0xf]
  %v2760 = vld [vmem:[%s5 + $0x114] sm:$0xf]
  %v2761 = vld [vmem:[%s5 + $0x118] sm:$0xf]
  %v2762 = vld [vmem:[%s5 + $0x11c] sm:$0xf]
  %v2763 = vld [vmem:[%s5 + $0x120] sm:$0xf]
  %v2764 = vld [vmem:[%s5 + $0x124] sm:$0xf]
  %v2765 = vld [vmem:[%s5 + $0x128] sm:$0xf]
  %v2766 = vld [vmem:[%s5 + $0x12c] sm:$0xf]
  %v2767 = vld [vmem:[%s5 + $0x130] sm:$0xf]
  %v2768 = vld [vmem:[%s5 + $0x134] sm:$0xf]
  %v2769 = vld [vmem:[%s5 + $0x138] sm:$0xf]
  %v2770 = vld [vmem:[%s5 + $0x13c] sm:$0xf]
  %v2771 = vld [vmem:[%s5 + $0x140] sm:$0xf]
  %v2772 = vld [vmem:[%s5 + $0x144] sm:$0xf]
  %v2773 = vld [vmem:[%s5 + $0x148] sm:$0xf]
  %v2774 = vld [vmem:[%s5 + $0x14c] sm:$0xf]
  %v2775 = vld [vmem:[%s5 + $0x150] sm:$0xf]
  %v2776 = vld [vmem:[%s5 + $0x154] sm:$0xf]
  %v2777 = vld [vmem:[%s5 + $0x158] sm:$0xf]
  %v2778 = vld [vmem:[%s5 + $0x15c] sm:$0xf]
  %v2779 = vld [vmem:[%s5 + $0x160] sm:$0xf]
  %v2780 = vld [vmem:[%s5 + $0x164] sm:$0xf]
  %v2781 = vld [vmem:[%s5 + $0x168] sm:$0xf]
  %v2782 = vld [vmem:[%s5 + $0x16c] sm:$0xf]
  %v2783 = vld [vmem:[%s5 + $0x170] sm:$0xf]
  %v2784 = vld [vmem:[%s5 + $0x174] sm:$0xf]
  %v2785 = vld [vmem:[%s5 + $0x178] sm:$0xf]
  %v2786 = vld [vmem:[%s5 + $0x17c] sm:$0xf]
  %v2787 = vld [vmem:[%s6] sm:$0x1]
  %v2789 = vlaneseq
  %v2790 = vshrl.u32 %v2789, 7
  %v2791 = vsub.s32 0, %v2790
  %v2792 = vrot.slane %v2787, %v2791
  %v2890 = vunpack.c.l.b16 %v2691
  %v2891 = vunpack.c.l.b16 %v2692
  %v2892 = vunpack.c.l.b16 %v2693
  %v2893 = vunpack.c.l.b16 %v2694
  %v2894 = vunpack.c.l.b16 %v2695
  %v2895 = vunpack.c.l.b16 %v2696
  %v2896 = vunpack.c.l.b16 %v2697
  %v2897 = vunpack.c.l.b16 %v2698
  %v2898 = vunpack.c.l.b16 %v2699
  %v2899 = vunpack.c.l.b16 %v2700
  %v2900 = vunpack.c.l.b16 %v2701
  %v2901 = vunpack.c.l.b16 %v2702
  %v2902 = vunpack.c.l.b16 %v2703
  %v2903 = vunpack.c.l.b16 %v2704
  %v2904 = vunpack.c.l.b16 %v2705
  %v2905 = vunpack.c.l.b16 %v2706
  %v2906 = vunpack.c.l.b16 %v2707
  %v2907 = vunpack.c.l.b16 %v2708
  %v2908 = vunpack.c.l.b16 %v2709
  %v2909 = vunpack.c.l.b16 %v2710
  %v2910 = vunpack.c.l.b16 %v2711
  %v2911 = vunpack.c.l.b16 %v2712
  %v2912 = vunpack.c.l.b16 %v2713
  %v2913 = vunpack.c.l.b16 %v2714
  %v2914 = vunpack.c.l.b16 %v2715
  %v2915 = vunpack.c.l.b16 %v2716
  %v2916 = vunpack.c.l.b16 %v2717
  %v2917 = vunpack.c.l.b16 %v2718
  %v2918 = vunpack.c.l.b16 %v2719
  %v2919 = vunpack.c.l.b16 %v2720
  %v2920 = vunpack.c.l.b16 %v2721
  %v2921 = vunpack.c.l.b16 %v2722
  %v2922 = vunpack.c.l.b16 %v2723
  %v2923 = vunpack.c.l.b16 %v2724
  %v2924 = vunpack.c.l.b16 %v2725
  %v2925 = vunpack.c.l.b16 %v2726
  %v2926 = vunpack.c.l.b16 %v2727
  %v2927 = vunpack.c.l.b16 %v2728
  %v2928 = vunpack.c.l.b16 %v2729
  %v2929 = vunpack.c.l.b16 %v2730
  %v2930 = vunpack.c.l.b16 %v2731
  %v2931 = vunpack.c.l.b16 %v2732
  %v2932 = vunpack.c.l.b16 %v2733
  %v2933 = vunpack.c.l.b16 %v2734
  %v2934 = vunpack.c.l.b16 %v2735
  %v2935 = vunpack.c.l.b16 %v2736
  %v2936 = vunpack.c.l.b16 %v2737
  %v2937 = vunpack.c.l.b16 %v2738
  %v2938 = vunpack.c.l.b16 %v2739
  %v2939 = vunpack.c.l.b16 %v2740
  %v2940 = vunpack.c.l.b16 %v2741
  %v2941 = vunpack.c.l.b16 %v2742
  %v2942 = vunpack.c.l.b16 %v2743
  %v2943 = vunpack.c.l.b16 %v2744
  %v2944 = vunpack.c.l.b16 %v2745
  %v2945 = vunpack.c.l.b16 %v2746
  %v2946 = vunpack.c.l.b16 %v2747
  %v2947 = vunpack.c.l.b16 %v2748
  %v2948 = vunpack.c.l.b16 %v2749
  %v2949 = vunpack.c.l.b16 %v2750
  %v2950 = vunpack.c.l.b16 %v2751
  %v2951 = vunpack.c.l.b16 %v2752
  %v2952 = vunpack.c.l.b16 %v2753
  %v2953 = vunpack.c.l.b16 %v2754
  %v2954 = vunpack.c.l.b16 %v2755
  %v2955 = vunpack.c.l.b16 %v2756
  %v2956 = vunpack.c.l.b16 %v2757
  %v2957 = vunpack.c.l.b16 %v2758
  %v2958 = vunpack.c.l.b16 %v2759
  %v2959 = vunpack.c.l.b16 %v2760
  %v2960 = vunpack.c.l.b16 %v2761
  %v2961 = vunpack.c.l.b16 %v2762
  %v2962 = vunpack.c.l.b16 %v2763
  %v2963 = vunpack.c.l.b16 %v2764
  %v2964 = vunpack.c.l.b16 %v2765
  %v2965 = vunpack.c.l.b16 %v2766
  %v2966 = vunpack.c.l.b16 %v2767
  %v2967 = vunpack.c.l.b16 %v2768
  %v2968 = vunpack.c.l.b16 %v2769
  %v2969 = vunpack.c.l.b16 %v2770
  %v2970 = vunpack.c.l.b16 %v2771
  %v2971 = vunpack.c.l.b16 %v2772
  %v2972 = vunpack.c.l.b16 %v2773
  %v2973 = vunpack.c.l.b16 %v2774
  %v2974 = vunpack.c.l.b16 %v2775
  %v2975 = vunpack.c.l.b16 %v2776
  %v2976 = vunpack.c.l.b16 %v2777
  %v2977 = vunpack.c.l.b16 %v2778
  %v2978 = vunpack.c.l.b16 %v2779
  %v2979 = vunpack.c.l.b16 %v2780
  %v2980 = vunpack.c.l.b16 %v2781
  %v2981 = vunpack.c.l.b16 %v2782
  %v2982 = vunpack.c.l.b16 %v2783
  %v2983 = vunpack.c.l.b16 %v2784
  %v2984 = vunpack.c.l.b16 %v2785
  %v2985 = vunpack.c.l.b16 %v2786
  %v2986 = vpack.c.b16 %v2891, %v2890
  %v2987 = vpack.c.b16 %v2893, %v2892
  %v2988 = vpack.c.b16 %v2895, %v2894
  %v2989 = vpack.c.b16 %v2897, %v2896
  %v2990 = vpack.c.b16 %v2899, %v2898
  %v2991 = vpack.c.b16 %v2901, %v2900
  %v2992 = vpack.c.b16 %v2903, %v2902
  %v2993 = vpack.c.b16 %v2905, %v2904
  %v2994 = vpack.c.b16 %v2907, %v2906
  %v2995 = vpack.c.b16 %v2909, %v2908
  %v2996 = vpack.c.b16 %v2911, %v2910
  %v2997 = vpack.c.b16 %v2913, %v2912
  %v2998 = vpack.c.b16 %v2915, %v2914
  %v2999 = vpack.c.b16 %v2917, %v2916
  %v3000 = vpack.c.b16 %v2919, %v2918
  %v3001 = vpack.c.b16 %v2921, %v2920
  %v3002 = vpack.c.b16 %v2923, %v2922
  %v3003 = vpack.c.b16 %v2925, %v2924
  %v3004 = vpack.c.b16 %v2927, %v2926
  %v3005 = vpack.c.b16 %v2929, %v2928
  %v3006 = vpack.c.b16 %v2931, %v2930
  %v3007 = vpack.c.b16 %v2933, %v2932
  %v3008 = vpack.c.b16 %v2935, %v2934
  %v3009 = vpack.c.b16 %v2937, %v2936
  %v3010 = vpack.c.b16 %v2939, %v2938
  %v3011 = vpack.c.b16 %v2941, %v2940
  %v3012 = vpack.c.b16 %v2943, %v2942
  %v3013 = vpack.c.b16 %v2945, %v2944
  %v3014 = vpack.c.b16 %v2947, %v2946
  %v3015 = vpack.c.b16 %v2949, %v2948
  %v3016 = vpack.c.b16 %v2951, %v2950
  %v3017 = vpack.c.b16 %v2953, %v2952
  %v3018 = vpack.c.b16 %v2955, %v2954
  %v3019 = vpack.c.b16 %v2957, %v2956
  %v3020 = vpack.c.b16 %v2959, %v2958
  %v3021 = vpack.c.b16 %v2961, %v2960
  %v3022 = vpack.c.b16 %v2963, %v2962
  %v3023 = vpack.c.b16 %v2965, %v2964
  %v3024 = vpack.c.b16 %v2967, %v2966
  %v3025 = vpack.c.b16 %v2969, %v2968
  %v3026 = vpack.c.b16 %v2971, %v2970
  %v3027 = vpack.c.b16 %v2973, %v2972
  %v3028 = vpack.c.b16 %v2975, %v2974
  %v3029 = vpack.c.b16 %v2977, %v2976
  %v3030 = vpack.c.b16 %v2979, %v2978
  %v3031 = vpack.c.b16 %v2981, %v2980
  %v3032 = vpack.c.b16 %v2983, %v2982
  %v3033 = vpack.c.b16 %v2985, %v2984
  %3082 = vmatprep.subr.bf16.mxu0 0
  %3083 = vmatpush1.bf16.msra.mxu0 %v2986
  %3084 = vmatprep.subr.bf16.mxu0 0
  %3085 = vmatpush1.bf16.msra.mxu0 %v2987
  %3086 = vmatprep.subr.bf16.mxu0 0
  %3087 = vmatpush1.bf16.msra.mxu0 %v2988
  %3088 = vmatprep.subr.bf16.mxu0 0
  %3089 = vmatpush1.bf16.msra.mxu0 %v2989
  %3090 = vmatprep.subr.bf16.mxu0 0
  %3091 = vmatpush1.bf16.msra.mxu0 %v2990
  %3092 = vmatprep.subr.bf16.mxu0 0
  %3093 = vmatpush1.bf16.msra.mxu0 %v2991
  %3094 = vmatprep.subr.bf16.mxu0 0
  %3095 = vmatpush1.bf16.msra.mxu0 %v2992
  %3096 = vmatprep.subr.bf16.mxu0 0
  %3097 = vmatpush1.bf16.msra.mxu0 %v2993
  %3098 = vmatprep.subr.bf16.mxu0 0
  %3099 = vmatpush1.bf16.msra.mxu0 %v2994
  %3100 = vmatprep.subr.bf16.mxu0 0
  %3101 = vmatpush1.bf16.msra.mxu0 %v2995
  %3102 = vmatprep.subr.bf16.mxu0 0
  %3103 = vmatpush1.bf16.msra.mxu0 %v2996
  %3104 = vmatprep.subr.bf16.mxu0 0
  %3105 = vmatpush1.bf16.msra.mxu0 %v2997
  %3106 = vmatprep.subr.bf16.mxu0 0
  %3107 = vmatpush1.bf16.msra.mxu0 %v2998
  %3108 = vmatprep.subr.bf16.mxu0 0
  %3109 = vmatpush1.bf16.msra.mxu0 %v2999
  %3110 = vmatprep.subr.bf16.mxu0 0
  %3111 = vmatpush1.bf16.msra.mxu0 %v3000
  %3112 = vmatprep.subr.bf16.mxu0 0
  %3113 = vmatpush1.bf16.msra.mxu0 %v3001
  %3114 = vmatprep.mubr.bf16.mxu0 %v2686
  %3115 = vmatmul.mubr.bf16.gmra.mrb[0].mxu0 %v2685
  %v3116 = vpop.f32.mrb[0].mxu0
  %v3117 = vadd.f32 %v2792, %v3116
  %v3118 = vpop.f32.mrb[0].mxu0
  %v3119 = vpop.f32.mrb[0].mxu0
  %v3120 = vadd.f32 %v2792, %v3119
  %v3121 = vpop.f32.mrb[0].mxu0
  %3122 = vdwg.mxu0
  %3123 = vmatprep.subr.bf16.mxu0 0
  %3124 = vmatpush1.bf16.msra.mxu0 %v3002
  %3125 = vmatprep.subr.bf16.mxu0 0
  %3126 = vmatpush1.bf16.msra.mxu0 %v3003
  %3127 = vmatprep.subr.bf16.mxu0 0
  %3128 = vmatpush1.bf16.msra.mxu0 %v3004
  %3129 = vmatprep.subr.bf16.mxu0 0
  %3130 = vmatpush1.bf16.msra.mxu0 %v3005
  %3131 = vmatprep.subr.bf16.mxu0 0
  %3132 = vmatpush1.bf16.msra.mxu0 %v3006
  %3133 = vmatprep.subr.bf16.mxu0 0
  %3134 = vmatpush1.bf16.msra.mxu0 %v3007
  %3135 = vmatprep.subr.bf16.mxu0 0
  %3136 = vmatpush1.bf16.msra.mxu0 %v3008
  %3137 = vmatprep.subr.bf16.mxu0 0
  %3138 = vmatpush1.bf16.msra.mxu0 %v3009
  %3139 = vmatprep.subr.bf16.mxu0 0
  %3140 = vmatpush1.bf16.msra.mxu0 %v3010
  %3141 = vmatprep.subr.bf16.mxu0 0
  %3142 = vmatpush1.bf16.msra.mxu0 %v3011
  %3143 = vmatprep.subr.bf16.mxu0 0
  %3144 = vmatpush1.bf16.msra.mxu0 %v3012
  %3145 = vmatprep.subr.bf16.mxu0 0
  %3146 = vmatpush1.bf16.msra.mxu0 %v3013
  %3147 = vmatprep.subr.bf16.mxu0 0
  %3148 = vmatpush1.bf16.msra.mxu0 %v3014
  %3149 = vmatprep.subr.bf16.mxu0 0
  %3150 = vmatpush1.bf16.msra.mxu0 %v3015
  %3151 = vmatprep.subr.bf16.mxu0 0
  %3152 = vmatpush1.bf16.msra.mxu0 %v3016
  %3153 = vmatprep.subr.bf16.mxu0 0
  %3154 = vmatpush1.bf16.msra.mxu0 %v3017
  %3155 = vmatprep.mubr.bf16.mxu0 %v2688
  %3156 = vmatmul.mubr.bf16.gmra.mrb[0].mxu0 %v2687
  %v3157 = vpop.f32.mrb[0].mxu0
  %v3158 = vadd.f32 %v3117, %v3157
  %v3159 = vpop.f32.mrb[0].mxu0
  %v3160 = vpop.f32.mrb[0].mxu0
  %v3161 = vadd.f32 %v3120, %v3160
  %v3162 = vpop.f32.mrb[0].mxu0
  %3163 = vdwg.mxu0
  %3164 = vmatprep.subr.bf16.mxu0 0
  %3165 = vmatpush1.bf16.msra.mxu0 %v3018
  %3166 = vmatprep.subr.bf16.mxu0 0
  %3167 = vmatpush1.bf16.msra.mxu0 %v3019
  %3168 = vmatprep.subr.bf16.mxu0 0
  %3169 = vmatpush1.bf16.msra.mxu0 %v3020
  %3170 = vmatprep.subr.bf16.mxu0 0
  %3171 = vmatpush1.bf16.msra.mxu0 %v3021
  %3172 = vmatprep.subr.bf16.mxu0 0
  %3173 = vmatpush1.bf16.msra.mxu0 %v3022
  %3174 = vmatprep.subr.bf16.mxu0 0
  %3175 = vmatpush1.bf16.msra.mxu0 %v3023
  %3176 = vmatprep.subr.bf16.mxu0 0
  %3177 = vmatpush1.bf16.msra.mxu0 %v3024
  %3178 = vmatprep.subr.bf16.mxu0 0
  %3179 = vmatpush1.bf16.msra.mxu0 %v3025
  %3180 = vmatprep.subr.bf16.mxu0 0
  %3181 = vmatpush1.bf16.msra.mxu0 %v3026
  %3182 = vmatprep.subr.bf16.mxu0 0
  %3183 = vmatpush1.bf16.msra.mxu0 %v3027
  %3184 = vmatprep.subr.bf16.mxu0 0
  %3185 = vmatpush1.bf16.msra.mxu0 %v3028
  %3186 = vmatprep.subr.bf16.mxu0 0
  %3187 = vmatpush1.bf16.msra.mxu0 %v3029
  %3188 = vmatprep.subr.bf16.mxu0 0
  %3189 = vmatpush1.bf16.msra.mxu0 %v3030
  %3190 = vmatprep.subr.bf16.mxu0 0
  %3191 = vmatpush1.bf16.msra.mxu0 %v3031
  %3192 = vmatprep.subr.bf16.mxu0 0
  %3193 = vmatpush1.bf16.msra.mxu0 %v3032
  %3194 = vmatprep.subr.bf16.mxu0 0
  %3195 = vmatpush1.bf16.msra.mxu0 %v3033
  %3196 = vmatprep.mubr.bf16.mxu0 %v2690
  %3197 = vmatmul.mubr.bf16.gmra.mrb[0].mxu0 %v2689
  %v3198 = vpop.f32.mrb[0].mxu0
  %v3199 = vadd.f32 %v3158, %v3198
  %v3200 = vpop.f32.mrb[0].mxu0
  %v3201 = vpop.f32.mrb[0].mxu0
  %v3202 = vadd.f32 %v3161, %v3201
  %v3203 = vpop.f32.mrb[0].mxu0
  %3204 = vdwg.mxu0
  %3205 = vst [vmem:[%s7] sm:$0xff] %v3199
  %3206 = vst [vmem:[%s7 + $0x8] sm:$0xff] %v3202
  // Predicated region
  $region30: #{_mlp_forward_impl.1} parent=0 // pred_check
    _
  $region31: #{_mlp_forward_impl.1} parent=0 // pred_check_branch
    %3208 = sbr.rel (0) target = $region33
  $region32: #{_mlp_forward_impl.1} parent=0 // pred_region
    _
  $region33: #{_mlp_forward_impl.1} parent=0 // pred_fallthru
    _
  // Predicated region
  $region34: #{_mlp_forward_impl.1} parent=0 // pred_check
    _
  $region35: #{_mlp_forward_impl.1} parent=0 // pred_check_branch
    %3210 = sbr.rel (0) target = $region37
  $region36: #{_mlp_forward_impl.1} parent=0 // pred_region
    _
  $region37: #{_mlp_forward_impl.1} parent=0 // pred_fallthru
    _

</llo_original>
